<compile_context>
chip_gen: v5e
topology: v5e:2x2
jax: 0.10.0
libtpu: 0.0.40
codegen_flags: <defaults>
</compile_context>

<pallas_src>
import math
import functools

import jax
import jax.numpy as jnp
from jax import lax
from jax.experimental import pallas as pl
from jax.experimental.pallas import tpu as pltpu


def transformer_block_kernel(x_ref, cos_ref, sin_ref,
                             wq_ref, wk_ref, wv_ref, wo_ref,
                             wg_ref, wh_ref, wout_ref,
                             g_attn_ref, g_ffn_ref,
                             o_ref, *, n_heads, eps):
    f32, bf16 = jnp.float32, jnp.bfloat16
    x = x_ref[0]                               # (L, D) f32, this batch element
    L, D = x.shape
    hd = D // n_heads
    half = hd // 2

    def rmsnorm(v, g):
        ms = jnp.mean(v * v, axis=-1, keepdims=True)
        return v * lax.rsqrt(ms + eps) * g

    # ---------------- attention ----------------
    xn = rmsnorm(x, g_attn_ref[...]).astype(bf16)                    # (L, D)
    q = jnp.dot(xn, wq_ref[...], preferred_element_type=f32)         # 1/scale folded in
    k = jnp.dot(xn, wk_ref[...], preferred_element_type=f32)
    v = jnp.dot(xn, wv_ref[...], preferred_element_type=f32)

    # head-major views (n_heads, L, hd); Wq/Wk were de-interleaved per head on host
    qh = jnp.stack([q[:, h * hd:(h + 1) * hd] for h in range(n_heads)], axis=0)
    kh = jnp.stack([k[:, h * hd:(h + 1) * hd] for h in range(n_heads)], axis=0)
    vh = jnp.stack([v[:, h * hd:(h + 1) * hd] for h in range(n_heads)],
                   axis=0).astype(bf16)

    cos = cos_ref[...]                         # (L, half) f32
    sin = sin_ref[...]

    def rope(t):                               # split layout: [even..., odd...] per head
        te, to = t[..., :half], t[..., half:]
        return jnp.concatenate([te * cos - to * sin, to * cos + te * sin], axis=-1)

    qr = rope(qh).astype(bf16)                 # (n_heads, L, hd)
    kr = rope(kh).astype(bf16)

    # scores (batched over heads, contracting last dims directly — no kh.T)
    s = jnp.einsum('nld,nmd->nlm', qr, kr, preferred_element_type=f32)

    # causal additive mask generated in-kernel (VPU compares, no HBM traffic)
    row = lax.broadcasted_iota(jnp.int32, (L, L), 0)
    col = lax.broadcasted_iota(jnp.int32, (L, L), 1)
    s = s + jnp.where(col <= row, jnp.float32(0.0), jnp.float32(-1e9))

    # stable softmax; reciprocal on the EUP
    s = s - jnp.max(s, axis=-1, keepdims=True)
    p = jnp.exp(s)
    p = p * pl.reciprocal(jnp.sum(p, axis=-1, keepdims=True), approx=True)

    o = jnp.einsum('nlm,nmd->nld', p.astype(bf16), vh,
                   preferred_element_type=f32)                       # (n_heads, L, hd)

    # re-concat heads, single fused output projection with K = D
    o_cat = jnp.concatenate([o[h] for h in range(n_heads)], axis=-1).astype(bf16)
    x = x + jnp.dot(o_cat, wo_ref[...], preferred_element_type=f32)

    # ---------------- SwiGLU FFN ----------------
    hn = rmsnorm(x, g_ffn_ref[...]).astype(bf16)
    gate = jnp.dot(hn, wg_ref[...], preferred_element_type=f32)      # (L, Dh)
    hid = jnp.dot(hn, wh_ref[...], preferred_element_type=f32)       # (L, Dh)
    act = (gate * jax.nn.sigmoid(gate) * hid).astype(bf16)           # SiLU(gate) * hidden
    o_ref[0] = x + jnp.dot(act, wout_ref[...], preferred_element_type=f32)


def transformer_block(x, cos, sin, params, *, n_heads):
    """x: (B, L, D) f32.  cos/sin: (L, hd/2) RoPE tables.  Causal mask is built in-kernel."""
    B, L, D = x.shape
    hd = D // n_heads
    half = hd // 2
    Dh = params["wg"].shape[0]
    scale = math.sqrt(D / n_heads)
    eps = 1e-6

    # de-interleave per-head columns of Wq/Wk ("split" RoPE layout): within each head
    # [0,2,...,hd-2, 1,3,...,hd-1].  Score q·k is invariant to a shared per-head
    # permutation of q and k, so semantics are preserved.
    split_idx = jnp.concatenate([jnp.arange(0, hd, 2), jnp.arange(1, hd, 2)])
    col_perm = (jnp.arange(n_heads)[:, None] * hd + split_idx[None, :]).reshape(D)

    # pre-transpose Linear weights (out,in)->(in,out); fold 1/scale into Wq; cast bf16
    wq_t = (params["wq"].T / scale)[:, col_perm].astype(jnp.bfloat16)
    wk_t = params["wk"].T[:, col_perm].astype(jnp.bfloat16)
    wv_t = params["wv"].T.astype(jnp.bfloat16)
    wo_t = params["wo"].T.astype(jnp.bfloat16)
    wg_t = params["wg"].T.astype(jnp.bfloat16)
    wh_t = params["wh"].T.astype(jnp.bfloat16)
    wout_t = params["wout"].T.astype(jnp.bfloat16)
    g_attn = params["g_attn"].reshape(1, D).astype(jnp.float32)
    g_ffn = params["g_ffn"].reshape(1, D).astype(jnp.float32)
    cos_f = cos.astype(jnp.float32)      # (L, half)
    sin_f = sin.astype(jnp.float32)

    kernel = functools.partial(transformer_block_kernel, n_heads=n_heads, eps=eps)

    full = lambda shape: pl.BlockSpec(shape, lambda b: (0,) * len(shape))
    return pl.pallas_call(
        kernel,
        out_shape=jax.ShapeDtypeStruct((B, L, D), jnp.float32),
        grid_spec=pltpu.PrefetchScalarGridSpec(
            num_scalar_prefetch=0,
            grid=(B,),
            in_specs=[
                pl.BlockSpec((1, L, D), lambda b: (b, 0, 0)),   # x
                full((L, half)),                                # cos
                full((L, half)),                                # sin
                full((D, D)),                                   # Wq^T (split, /scale)
                full((D, D)),                                   # Wk^T (split)
                full((D, D)),                                   # Wv^T
                full((D, D)),                                   # Wo^T
                full((D, Dh)),                                  # Wg^T
                full((D, Dh)),                                  # Wh^T
                full((Dh, D)),                                  # Wout^T
                full((1, D)),                                   # attn_norm weight
                full((1, D)),                                   # ffn_norm weight
            ],
            out_specs=pl.BlockSpec((1, L, D), lambda b: (b, 0, 0)),
        ),
        compiler_params=pltpu.CompilerParams(
            dimension_semantics=("parallel",),
            vmem_limit_bytes=32 * 1024 * 1024,
        ),
    )(x, cos_f, sin_f, wq_t, wk_t, wv_t, wo_t, wg_t, wh_t, wout_t, g_attn, g_ffn)


# ---------------------------- pure-JAX f32 reference ----------------------------
def reference_block(x, cos, sin, mask, params, *, n_heads):
    B, L, D = x.shape
    hd = D // n_heads
    eps = 1e-6
    scale = math.sqrt(D / n_heads)

    def rms(v, g):
        return v * lax.rsqrt(jnp.mean(v * v, -1, keepdims=True) + eps) * g

    def rope(t):  # t: (B, n, L, hd); mimics torch.view_as_complex multiply
        te, to = t[..., 0::2], t[..., 1::2]
        oe = te * cos - to * sin
        oo = te * sin + to * cos
        return jnp.stack([oe, oo], axis=-1).reshape(t.shape)

    xn = rms(x, params["g_attn"])

    def heads(w):
        return (xn @ w.T).reshape(B, L, n_heads, hd).transpose(0, 2, 1, 3)

    q, k, v = heads(params["wq"]), heads(params["wk"]), heads(params["wv"])
    attn = jnp.einsum("bnld,bnmd->bnlm", rope(q), rope(k)) / scale
    p = jax.nn.softmax(attn + mask, axis=-1)
    o = jnp.einsum("bnlm,bnmd->bnld", p, v).transpose(0, 2, 1, 3).reshape(B, L, D)
    x = x + o @ params["wo"].T

    hn = rms(x, params["g_ffn"])
    gate = hn @ params["wg"].T
    hid = hn @ params["wh"].T
    return x + (jax.nn.silu(gate) * hid) @ params["wout"].T


if __name__ == "__main__":
    B, L, D, n_heads = 2, 8, 32, 4
    hd = D // n_heads
    Dh = 4 * D

    key = jax.random.PRNGKey(0)
    ks = jax.random.split(key, 10)
    s = 0.1
    params = {
        "wq": jax.random.normal(ks[0], (D, D), jnp.float32) * s,
        "wk": jax.random.normal(ks[1], (D, D), jnp.float32) * s,
        "wv": jax.random.normal(ks[2], (D, D), jnp.float32) * s,
        "wo": jax.random.normal(ks[3], (D, D), jnp.float32) * s,
        "wg": jax.random.normal(ks[4], (Dh, D), jnp.float32) * s,
        "wh": jax.random.normal(ks[5], (Dh, D), jnp.float32) * s,
        "wout": jax.random.normal(ks[6], (D, Dh), jnp.float32) * s,
        "g_attn": jnp.ones((D,), jnp.float32),   # nn.RMSNorm default init
        "g_ffn": jnp.ones((D,), jnp.float32),
    }

    x = jax.random.normal(ks[7], (B, L, D), jnp.float32)

    # RoPE freqs (the complex `freqs` in PyTorch is cos + i*sin of these angles)
    half = hd // 2
    inv_freq = 1.0 / (10000.0 ** (jnp.arange(half, dtype=jnp.float32) * 2.0 / hd))
    ang = jnp.outer(jnp.arange(L, dtype=jnp.float32), inv_freq)       # (L, hd/2)
    cos, sin = jnp.cos(ang), jnp.sin(ang)

    out = transformer_block(x, cos, sin, params, n_heads=n_heads)
    out = jax.block_until_ready(out)

    # reference uses the same additive causal mask the kernel generates internally
    mask = jnp.where(jnp.tril(jnp.ones((L, L), bool)), 0.0, -1e9).astype(jnp.float32)
    ref = reference_block(x, cos, sin, mask, params, n_heads=n_heads)

    assert out.shape == (B, L, D)
    # bf16 MXU matmuls vs. f32 reference -> a few % tolerance
    err = float(jnp.max(jnp.abs(out - ref)))
    assert jnp.allclose(out, ref, atol=5e-2, rtol=5e-2), err
    print("KERNEL_OK")
</pallas_src>

<mosaic_0001>
module attributes {stable_mosaic.version = 11 : i64} {
  func.func @transformer_block_kernel(%arg0: i32, %arg1: memref<1x8x32xf32, #tpu.memory_space<vmem>>, %arg2: memref<8x4xf32, #tpu.memory_space<vmem>>, %arg3: memref<8x4xf32, #tpu.memory_space<vmem>>, %arg4: memref<32x32xbf16, #tpu.memory_space<vmem>>, %arg5: memref<32x32xbf16, #tpu.memory_space<vmem>>, %arg6: memref<32x32xbf16, #tpu.memory_space<vmem>>, %arg7: memref<32x32xbf16, #tpu.memory_space<vmem>>, %arg8: memref<32x128xbf16, #tpu.memory_space<vmem>>, %arg9: memref<32x128xbf16, #tpu.memory_space<vmem>>, %arg10: memref<128x32xbf16, #tpu.memory_space<vmem>>, %arg11: memref<1x32xf32, #tpu.memory_space<vmem>>, %arg12: memref<1x32xf32, #tpu.memory_space<vmem>>, %arg13: memref<1x8x32xf32, #tpu.memory_space<vmem>>) attributes {dimension_semantics = [#tpu.dimension_semantics<parallel>], iteration_bounds = array<i64: 2>, scalar_prefetch = 0 : i64, scratch_operands = 0 : i64, tpu.core_type = #tpu.core_type<tc>, window_params = [{transform_indices = @transform_0, window_bounds = array<i64: 1, 8, 32>}, {pipeline_mode = #tpu.pipeline_mode<synchronous>, transform_indices = @transform_1, window_bounds = array<i64: 8, 4>}, {pipeline_mode = #tpu.pipeline_mode<synchronous>, transform_indices = @transform_2, window_bounds = array<i64: 8, 4>}, {pipeline_mode = #tpu.pipeline_mode<synchronous>, transform_indices = @transform_3, window_bounds = array<i64: 32, 32>}, {pipeline_mode = #tpu.pipeline_mode<synchronous>, transform_indices = @transform_4, window_bounds = array<i64: 32, 32>}, {pipeline_mode = #tpu.pipeline_mode<synchronous>, transform_indices = @transform_5, window_bounds = array<i64: 32, 32>}, {pipeline_mode = #tpu.pipeline_mode<synchronous>, transform_indices = @transform_6, window_bounds = array<i64: 32, 32>}, {pipeline_mode = #tpu.pipeline_mode<synchronous>, transform_indices = @transform_7, window_bounds = array<i64: 32, 128>}, {pipeline_mode = #tpu.pipeline_mode<synchronous>, transform_indices = @transform_8, window_bounds = array<i64: 32, 128>}, {pipeline_mode = #tpu.pipeline_mode<synchronous>, transform_indices = @transform_9, window_bounds = array<i64: 128, 32>}, {pipeline_mode = #tpu.pipeline_mode<synchronous>, transform_indices = @transform_10, window_bounds = array<i64: 1, 32>}, {pipeline_mode = #tpu.pipeline_mode<synchronous>, transform_indices = @transform_11, window_bounds = array<i64: 1, 32>}, {transform_indices = @transform_12, window_bounds = array<i64: 1, 8, 32>}]} {
    %c0 = arith.constant 0 : index
    %c0_0 = arith.constant 0 : index
    %c0_1 = arith.constant 0 : index
    %0 = vector.load %arg1[%c0, %c0_0, %c0_1] : memref<1x8x32xf32, #tpu.memory_space<vmem>>, vector<1x8x32xf32>
    %1 = vector.shape_cast %0 : vector<1x8x32xf32> to vector<8x32xf32>
    %c0_2 = arith.constant 0 : index
    %c0_3 = arith.constant 0 : index
    %2 = vector.load %arg11[%c0_2, %c0_3] : memref<1x32xf32, #tpu.memory_space<vmem>>, vector<1x32xf32>
    %3 = arith.mulf %1, %1 : vector<8x32xf32>
    %cst = arith.constant dense<0.000000e+00> : vector<8xf32>
    %4 = vector.multi_reduction <add>, %3, %cst [1] : vector<8x32xf32> to vector<8xf32>
    %5 = vector.shape_cast %4 : vector<8xf32> to vector<8x1xf32>
    %cst_4 = arith.constant 3.200000e+01 : f32
    %6 = vector.broadcast %cst_4 : f32 to vector<8x1xf32>
    %7 = arith.divf %5, %6 : vector<8x1xf32>
    %cst_5 = arith.constant 9.99999997E-7 : f32
    %8 = vector.broadcast %cst_5 : f32 to vector<8x1xf32>
    %9 = arith.addf %7, %8 : vector<8x1xf32>
    %10 = math.rsqrt %9 : vector<8x1xf32>
    %11 = vector.broadcast %10 : vector<8x1xf32> to vector<8x32xf32>
    %12 = arith.mulf %1, %11 : vector<8x32xf32>
    %13 = vector.broadcast %2 : vector<1x32xf32> to vector<8x32xf32>
    %14 = arith.mulf %12, %13 : vector<8x32xf32>
    %15 = arith.truncf %14 : vector<8x32xf32> to vector<8x32xbf16>
    %c0_6 = arith.constant 0 : index
    %c0_7 = arith.constant 0 : index
    %16 = vector.load %arg4[%c0_6, %c0_7] : memref<32x32xbf16, #tpu.memory_space<vmem>>, vector<32x32xbf16>
    %cst_8 = arith.constant dense<0.000000e+00> : vector<8x32xf32>
    %17 = tpu.matmul %15, %16, %cst_8 {dimension_numbers = #tpu.dot_dimension_numbers<[1], [0], [0], [1], [0, 0, 1, 1], [], []>} : vector<8x32xbf16>, vector<32x32xbf16>, vector<8x32xf32> -> vector<8x32xf32>
    %c0_9 = arith.constant 0 : index
    %c0_10 = arith.constant 0 : index
    %18 = vector.load %arg5[%c0_9, %c0_10] : memref<32x32xbf16, #tpu.memory_space<vmem>>, vector<32x32xbf16>
    %cst_11 = arith.constant dense<0.000000e+00> : vector<8x32xf32>
    %19 = tpu.matmul %15, %18, %cst_11 {dimension_numbers = #tpu.dot_dimension_numbers<[1], [0], [0], [1], [0, 0, 1, 1], [], []>} : vector<8x32xbf16>, vector<32x32xbf16>, vector<8x32xf32> -> vector<8x32xf32>
    %c0_12 = arith.constant 0 : index
    %c0_13 = arith.constant 0 : index
    %20 = vector.load %arg6[%c0_12, %c0_13] : memref<32x32xbf16, #tpu.memory_space<vmem>>, vector<32x32xbf16>
    %cst_14 = arith.constant dense<0.000000e+00> : vector<8x32xf32>
    %21 = tpu.matmul %15, %20, %cst_14 {dimension_numbers = #tpu.dot_dimension_numbers<[1], [0], [0], [1], [0, 0, 1, 1], [], []>} : vector<8x32xbf16>, vector<32x32xbf16>, vector<8x32xf32> -> vector<8x32xf32>
    %22 = vector.extract_strided_slice %17 {offsets = [0, 0], sizes = [8, 8], strides = [1, 1]} : vector<8x32xf32> to vector<8x8xf32>
    %23 = vector.extract_strided_slice %17 {offsets = [0, 8], sizes = [8, 8], strides = [1, 1]} : vector<8x32xf32> to vector<8x8xf32>
    %24 = vector.extract_strided_slice %17 {offsets = [0, 16], sizes = [8, 8], strides = [1, 1]} : vector<8x32xf32> to vector<8x8xf32>
    %25 = vector.extract_strided_slice %17 {offsets = [0, 24], sizes = [8, 8], strides = [1, 1]} : vector<8x32xf32> to vector<8x8xf32>
    %26 = vector.shape_cast %22 : vector<8x8xf32> to vector<1x8x8xf32>
    %27 = vector.shape_cast %23 : vector<8x8xf32> to vector<1x8x8xf32>
    %28 = vector.shape_cast %24 : vector<8x8xf32> to vector<1x8x8xf32>
    %29 = vector.shape_cast %25 : vector<8x8xf32> to vector<1x8x8xf32>
    %30 = tpu.concatenate %26, %27, %28, %29 in 0 : vector<1x8x8xf32>, vector<1x8x8xf32>, vector<1x8x8xf32>, vector<1x8x8xf32> -> vector<4x8x8xf32>
    %31 = vector.extract_strided_slice %19 {offsets = [0, 0], sizes = [8, 8], strides = [1, 1]} : vector<8x32xf32> to vector<8x8xf32>
    %32 = vector.extract_strided_slice %19 {offsets = [0, 8], sizes = [8, 8], strides = [1, 1]} : vector<8x32xf32> to vector<8x8xf32>
    %33 = vector.extract_strided_slice %19 {offsets = [0, 16], sizes = [8, 8], strides = [1, 1]} : vector<8x32xf32> to vector<8x8xf32>
    %34 = vector.extract_strided_slice %19 {offsets = [0, 24], sizes = [8, 8], strides = [1, 1]} : vector<8x32xf32> to vector<8x8xf32>
    %35 = vector.shape_cast %31 : vector<8x8xf32> to vector<1x8x8xf32>
    %36 = vector.shape_cast %32 : vector<8x8xf32> to vector<1x8x8xf32>
    %37 = vector.shape_cast %33 : vector<8x8xf32> to vector<1x8x8xf32>
    %38 = vector.shape_cast %34 : vector<8x8xf32> to vector<1x8x8xf32>
    %39 = tpu.concatenate %35, %36, %37, %38 in 0 : vector<1x8x8xf32>, vector<1x8x8xf32>, vector<1x8x8xf32>, vector<1x8x8xf32> -> vector<4x8x8xf32>
    %40 = vector.extract_strided_slice %21 {offsets = [0, 0], sizes = [8, 8], strides = [1, 1]} : vector<8x32xf32> to vector<8x8xf32>
    %41 = vector.extract_strided_slice %21 {offsets = [0, 8], sizes = [8, 8], strides = [1, 1]} : vector<8x32xf32> to vector<8x8xf32>
    %42 = vector.extract_strided_slice %21 {offsets = [0, 16], sizes = [8, 8], strides = [1, 1]} : vector<8x32xf32> to vector<8x8xf32>
    %43 = vector.extract_strided_slice %21 {offsets = [0, 24], sizes = [8, 8], strides = [1, 1]} : vector<8x32xf32> to vector<8x8xf32>
    %44 = vector.shape_cast %40 : vector<8x8xf32> to vector<1x8x8xf32>
    %45 = vector.shape_cast %41 : vector<8x8xf32> to vector<1x8x8xf32>
    %46 = vector.shape_cast %42 : vector<8x8xf32> to vector<1x8x8xf32>
    %47 = vector.shape_cast %43 : vector<8x8xf32> to vector<1x8x8xf32>
    %48 = tpu.concatenate %44, %45, %46, %47 in 0 : vector<1x8x8xf32>, vector<1x8x8xf32>, vector<1x8x8xf32>, vector<1x8x8xf32> -> vector<4x8x8xf32>
    %49 = arith.truncf %48 : vector<4x8x8xf32> to vector<4x8x8xbf16>
    %c0_15 = arith.constant 0 : index
    %c0_16 = arith.constant 0 : index
    %50 = vector.load %arg2[%c0_15, %c0_16] : memref<8x4xf32, #tpu.memory_space<vmem>>, vector<8x4xf32>
    %c0_17 = arith.constant 0 : index
    %c0_18 = arith.constant 0 : index
    %51 = vector.load %arg3[%c0_17, %c0_18] : memref<8x4xf32, #tpu.memory_space<vmem>>, vector<8x4xf32>
    %52 = vector.extract_strided_slice %30 {offsets = [0, 0, 0], sizes = [4, 8, 4], strides = [1, 1, 1]} : vector<4x8x8xf32> to vector<4x8x4xf32>
    %53 = vector.extract_strided_slice %30 {offsets = [0, 0, 4], sizes = [4, 8, 4], strides = [1, 1, 1]} : vector<4x8x8xf32> to vector<4x8x4xf32>
    %54 = vector.shape_cast %50 : vector<8x4xf32> to vector<1x8x4xf32>
    %55 = vector.broadcast %54 : vector<1x8x4xf32> to vector<4x8x4xf32>
    %56 = arith.mulf %52, %55 : vector<4x8x4xf32>
    %57 = vector.shape_cast %51 : vector<8x4xf32> to vector<1x8x4xf32>
    %58 = vector.broadcast %57 : vector<1x8x4xf32> to vector<4x8x4xf32>
    %59 = arith.mulf %53, %58 : vector<4x8x4xf32>
    %60 = arith.subf %56, %59 : vector<4x8x4xf32>
    %61 = vector.shape_cast %50 : vector<8x4xf32> to vector<1x8x4xf32>
    %62 = vector.broadcast %61 : vector<1x8x4xf32> to vector<4x8x4xf32>
    %63 = arith.mulf %53, %62 : vector<4x8x4xf32>
    %64 = vector.shape_cast %51 : vector<8x4xf32> to vector<1x8x4xf32>
    %65 = vector.broadcast %64 : vector<1x8x4xf32> to vector<4x8x4xf32>
    %66 = arith.mulf %52, %65 : vector<4x8x4xf32>
    %67 = arith.addf %63, %66 : vector<4x8x4xf32>
    %68 = tpu.concatenate %60, %67 in 2 : vector<4x8x4xf32>, vector<4x8x4xf32> -> vector<4x8x8xf32>
    %69 = arith.truncf %68 : vector<4x8x8xf32> to vector<4x8x8xbf16>
    %70 = vector.extract_strided_slice %39 {offsets = [0, 0, 0], sizes = [4, 8, 4], strides = [1, 1, 1]} : vector<4x8x8xf32> to vector<4x8x4xf32>
    %71 = vector.extract_strided_slice %39 {offsets = [0, 0, 4], sizes = [4, 8, 4], strides = [1, 1, 1]} : vector<4x8x8xf32> to vector<4x8x4xf32>
    %72 = vector.shape_cast %50 : vector<8x4xf32> to vector<1x8x4xf32>
    %73 = vector.broadcast %72 : vector<1x8x4xf32> to vector<4x8x4xf32>
    %74 = arith.mulf %70, %73 : vector<4x8x4xf32>
    %75 = vector.shape_cast %51 : vector<8x4xf32> to vector<1x8x4xf32>
    %76 = vector.broadcast %75 : vector<1x8x4xf32> to vector<4x8x4xf32>
    %77 = arith.mulf %71, %76 : vector<4x8x4xf32>
    %78 = arith.subf %74, %77 : vector<4x8x4xf32>
    %79 = vector.shape_cast %50 : vector<8x4xf32> to vector<1x8x4xf32>
    %80 = vector.broadcast %79 : vector<1x8x4xf32> to vector<4x8x4xf32>
    %81 = arith.mulf %71, %80 : vector<4x8x4xf32>
    %82 = vector.shape_cast %51 : vector<8x4xf32> to vector<1x8x4xf32>
    %83 = vector.broadcast %82 : vector<1x8x4xf32> to vector<4x8x4xf32>
    %84 = arith.mulf %70, %83 : vector<4x8x4xf32>
    %85 = arith.addf %81, %84 : vector<4x8x4xf32>
    %86 = tpu.concatenate %78, %85 in 2 : vector<4x8x4xf32>, vector<4x8x4xf32> -> vector<4x8x8xf32>
    %87 = arith.truncf %86 : vector<4x8x8xf32> to vector<4x8x8xbf16>
    "tpu.trace_start"() <{level = 10 : i32, message = "nld,nmd->nlm"}> : () -> ()
    %cst_19 = arith.constant dense<0.000000e+00> : vector<4x8x8xf32>
    %88 = tpu.matmul %69, %87, %cst_19 {dimension_numbers = #tpu.dot_dimension_numbers<[2], [2], [1], [1], [0, 0, 0, 1, 1, 1], [0], [0]>} : vector<4x8x8xbf16>, vector<4x8x8xbf16>, vector<4x8x8xf32> -> vector<4x8x8xf32>
    "tpu.trace_stop"() : () -> ()
    %89 = tpu.iota {dimensions = array<i32: 0>} : vector<8x8xi32>
    %90 = tpu.iota {dimensions = array<i32: 1>} : vector<8x8xi32>
    %91 = arith.cmpi sle, %90, %89 : vector<8x8xi32>
    %cst_20 = arith.constant 0.000000e+00 : f32
    %cst_21 = arith.constant -1.000000e+09 : f32
    %92 = vector.broadcast %cst_20 : f32 to vector<8x8xf32>
    %93 = vector.broadcast %cst_21 : f32 to vector<8x8xf32>
    %94 = arith.select %91, %92, %93 : vector<8x8xi1>, vector<8x8xf32>
    %95 = vector.shape_cast %94 : vector<8x8xf32> to vector<1x8x8xf32>
    %96 = vector.broadcast %95 : vector<1x8x8xf32> to vector<4x8x8xf32>
    %97 = arith.addf %88, %96 : vector<4x8x8xf32>
    %cst_22 = arith.constant dense<0xFF800000> : vector<4x8xf32>
    %98 = vector.multi_reduction <maximumf>, %97, %cst_22 [2] : vector<4x8x8xf32> to vector<4x8xf32>
    %99 = vector.shape_cast %98 : vector<4x8xf32> to vector<4x8x1xf32>
    %100 = vector.broadcast %99 : vector<4x8x1xf32> to vector<4x8x8xf32>
    %101 = arith.subf %97, %100 : vector<4x8x8xf32>
    %102 = math.exp %101 : vector<4x8x8xf32>
    %cst_23 = arith.constant dense<0.000000e+00> : vector<4x8xf32>
    %103 = vector.multi_reduction <add>, %102, %cst_23 [2] : vector<4x8x8xf32> to vector<4x8xf32>
    %104 = vector.shape_cast %103 : vector<4x8xf32> to vector<4x8x1xf32>
    %105 = tpu.reciprocal %104 {approx = true} : vector<4x8x1xf32> -> vector<4x8x1xf32>
    %106 = vector.broadcast %105 : vector<4x8x1xf32> to vector<4x8x8xf32>
    %107 = arith.mulf %102, %106 : vector<4x8x8xf32>
    %108 = arith.truncf %107 : vector<4x8x8xf32> to vector<4x8x8xbf16>
    "tpu.trace_start"() <{level = 10 : i32, message = "nlm,nmd->nld"}> : () -> ()
    %cst_24 = arith.constant dense<0.000000e+00> : vector<4x8x8xf32>
    %109 = tpu.matmul %108, %49, %cst_24 {dimension_numbers = #tpu.dot_dimension_numbers<[2], [1], [1], [2], [0, 0, 0, 1, 1, 2], [0], [0]>} : vector<4x8x8xbf16>, vector<4x8x8xbf16>, vector<4x8x8xf32> -> vector<4x8x8xf32>
    "tpu.trace_stop"() : () -> ()
    %110 = vector.extract_strided_slice %109 {offsets = [0, 0, 0], sizes = [1, 8, 8], strides = [1, 1, 1]} : vector<4x8x8xf32> to vector<1x8x8xf32>
    %111 = vector.shape_cast %110 : vector<1x8x8xf32> to vector<8x8xf32>
    %112 = vector.extract_strided_slice %109 {offsets = [1, 0, 0], sizes = [1, 8, 8], strides = [1, 1, 1]} : vector<4x8x8xf32> to vector<1x8x8xf32>
    %113 = vector.shape_cast %112 : vector<1x8x8xf32> to vector<8x8xf32>
    %114 = vector.extract_strided_slice %109 {offsets = [2, 0, 0], sizes = [1, 8, 8], strides = [1, 1, 1]} : vector<4x8x8xf32> to vector<1x8x8xf32>
    %115 = vector.shape_cast %114 : vector<1x8x8xf32> to vector<8x8xf32>
    %116 = vector.extract_strided_slice %109 {offsets = [3, 0, 0], sizes = [1, 8, 8], strides = [1, 1, 1]} : vector<4x8x8xf32> to vector<1x8x8xf32>
    %117 = vector.shape_cast %116 : vector<1x8x8xf32> to vector<8x8xf32>
    %118 = tpu.concatenate %111, %113, %115, %117 in 1 : vector<8x8xf32>, vector<8x8xf32>, vector<8x8xf32>, vector<8x8xf32> -> vector<8x32xf32>
    %119 = arith.truncf %118 : vector<8x32xf32> to vector<8x32xbf16>
    %c0_25 = arith.constant 0 : index
    %c0_26 = arith.constant 0 : index
    %120 = vector.load %arg7[%c0_25, %c0_26] : memref<32x32xbf16, #tpu.memory_space<vmem>>, vector<32x32xbf16>
    %cst_27 = arith.constant dense<0.000000e+00> : vector<8x32xf32>
    %121 = tpu.matmul %119, %120, %cst_27 {dimension_numbers = #tpu.dot_dimension_numbers<[1], [0], [0], [1], [0, 0, 1, 1], [], []>} : vector<8x32xbf16>, vector<32x32xbf16>, vector<8x32xf32> -> vector<8x32xf32>
    %122 = arith.addf %1, %121 : vector<8x32xf32>
    %c0_28 = arith.constant 0 : index
    %c0_29 = arith.constant 0 : index
    %123 = vector.load %arg12[%c0_28, %c0_29] : memref<1x32xf32, #tpu.memory_space<vmem>>, vector<1x32xf32>
    %124 = arith.mulf %122, %122 : vector<8x32xf32>
    %cst_30 = arith.constant dense<0.000000e+00> : vector<8xf32>
    %125 = vector.multi_reduction <add>, %124, %cst_30 [1] : vector<8x32xf32> to vector<8xf32>
    %126 = vector.shape_cast %125 : vector<8xf32> to vector<8x1xf32>
    %cst_31 = arith.constant 3.200000e+01 : f32
    %127 = vector.broadcast %cst_31 : f32 to vector<8x1xf32>
    %128 = arith.divf %126, %127 : vector<8x1xf32>
    %cst_32 = arith.constant 9.99999997E-7 : f32
    %129 = vector.broadcast %cst_32 : f32 to vector<8x1xf32>
    %130 = arith.addf %128, %129 : vector<8x1xf32>
    %131 = math.rsqrt %130 : vector<8x1xf32>
    %132 = vector.broadcast %131 : vector<8x1xf32> to vector<8x32xf32>
    %133 = arith.mulf %122, %132 : vector<8x32xf32>
    %134 = vector.broadcast %123 : vector<1x32xf32> to vector<8x32xf32>
    %135 = arith.mulf %133, %134 : vector<8x32xf32>
    %136 = arith.truncf %135 : vector<8x32xf32> to vector<8x32xbf16>
    %c0_33 = arith.constant 0 : index
    %c0_34 = arith.constant 0 : index
    %137 = vector.load %arg8[%c0_33, %c0_34] : memref<32x128xbf16, #tpu.memory_space<vmem>>, vector<32x128xbf16>
    %cst_35 = arith.constant dense<0.000000e+00> : vector<8x128xf32>
    %138 = tpu.matmul %136, %137, %cst_35 {dimension_numbers = #tpu.dot_dimension_numbers<[1], [0], [0], [1], [0, 0, 1, 1], [], []>} : vector<8x32xbf16>, vector<32x128xbf16>, vector<8x128xf32> -> vector<8x128xf32>
    %c0_36 = arith.constant 0 : index
    %c0_37 = arith.constant 0 : index
    %139 = vector.load %arg9[%c0_36, %c0_37] : memref<32x128xbf16, #tpu.memory_space<vmem>>, vector<32x128xbf16>
    %cst_38 = arith.constant dense<0.000000e+00> : vector<8x128xf32>
    %140 = tpu.matmul %136, %139, %cst_38 {dimension_numbers = #tpu.dot_dimension_numbers<[1], [0], [0], [1], [0, 0, 1, 1], [], []>} : vector<8x32xbf16>, vector<32x128xbf16>, vector<8x128xf32> -> vector<8x128xf32>
    %141 = arith.negf %138 : vector<8x128xf32>
    %142 = math.exp %141 : vector<8x128xf32>
    %cst_39 = arith.constant 1.000000e+00 : f32
    %143 = vector.broadcast %cst_39 : f32 to vector<8x128xf32>
    %144 = arith.addf %143, %142 : vector<8x128xf32>
    %145 = arith.divf %143, %144 : vector<8x128xf32>
    %146 = arith.mulf %138, %145 : vector<8x128xf32>
    %147 = arith.mulf %146, %140 : vector<8x128xf32>
    %148 = arith.truncf %147 : vector<8x128xf32> to vector<8x128xbf16>
    %c0_40 = arith.constant 0 : index
    %c0_41 = arith.constant 0 : index
    %149 = vector.load %arg10[%c0_40, %c0_41] : memref<128x32xbf16, #tpu.memory_space<vmem>>, vector<128x32xbf16>
    %cst_42 = arith.constant dense<0.000000e+00> : vector<8x32xf32>
    %150 = tpu.matmul %148, %149, %cst_42 {dimension_numbers = #tpu.dot_dimension_numbers<[1], [0], [0], [1], [0, 0, 1, 1], [], []>} : vector<8x128xbf16>, vector<128x32xbf16>, vector<8x32xf32> -> vector<8x32xf32>
    %151 = arith.addf %122, %150 : vector<8x32xf32>
    %c0_43 = arith.constant 0 : index
    %c0_44 = arith.constant 0 : index
    %c0_45 = arith.constant 0 : index
    %152 = vector.load %arg13[%c0_43, %c0_44, %c0_45] : memref<1x8x32xf32, #tpu.memory_space<vmem>>, vector<1x8x32xf32>
    %153 = vector.shape_cast %152 : vector<1x8x32xf32> to vector<8x32xf32>
    %154 = vector.shape_cast %151 : vector<8x32xf32> to vector<1x8x32xf32>
    tpu.vector_store %arg13[%c0_43, %c0_44, %c0_45], %154 {strides = array<i32>} : memref<1x8x32xf32, #tpu.memory_space<vmem>>, vector<1x8x32xf32>,
    return
  }
  func.func @transform_0(%arg0: i32) -> (i32, i32, i32) {
    %c0_i32 = arith.constant 0 : i32
    %c0_i32_0 = arith.constant 0 : i32
    %c0_i32_1 = arith.constant 0 : i32
    return %arg0, %c0_i32, %c0_i32_0 : i32, i32, i32
  }
  func.func @transform_1(%arg0: i32) -> (i32, i32) {
    %c0_i32 = arith.constant 0 : i32
    %c0_i32_0 = arith.constant 0 : i32
    %c0_i32_1 = arith.constant 0 : i32
    return %c0_i32, %c0_i32_0 : i32, i32
  }
  func.func @transform_2(%arg0: i32) -> (i32, i32) {
    %c0_i32 = arith.constant 0 : i32
    %c0_i32_0 = arith.constant 0 : i32
    %c0_i32_1 = arith.constant 0 : i32
    return %c0_i32, %c0_i32_0 : i32, i32
  }
  func.func @transform_3(%arg0: i32) -> (i32, i32) {
    %c0_i32 = arith.constant 0 : i32
    %c0_i32_0 = arith.constant 0 : i32
    %c0_i32_1 = arith.constant 0 : i32
    return %c0_i32, %c0_i32_0 : i32, i32
  }
  func.func @transform_4(%arg0: i32) -> (i32, i32) {
    %c0_i32 = arith.constant 0 : i32
    %c0_i32_0 = arith.constant 0 : i32
    %c0_i32_1 = arith.constant 0 : i32
    return %c0_i32, %c0_i32_0 : i32, i32
  }
  func.func @transform_5(%arg0: i32) -> (i32, i32) {
    %c0_i32 = arith.constant 0 : i32
    %c0_i32_0 = arith.constant 0 : i32
    %c0_i32_1 = arith.constant 0 : i32
    return %c0_i32, %c0_i32_0 : i32, i32
  }
  func.func @transform_6(%arg0: i32) -> (i32, i32) {
    %c0_i32 = arith.constant 0 : i32
    %c0_i32_0 = arith.constant 0 : i32
    %c0_i32_1 = arith.constant 0 : i32
    return %c0_i32, %c0_i32_0 : i32, i32
  }
  func.func @transform_7(%arg0: i32) -> (i32, i32) {
    %c0_i32 = arith.constant 0 : i32
    %c0_i32_0 = arith.constant 0 : i32
    %c0_i32_1 = arith.constant 0 : i32
    return %c0_i32, %c0_i32_0 : i32, i32
  }
  func.func @transform_8(%arg0: i32) -> (i32, i32) {
    %c0_i32 = arith.constant 0 : i32
    %c0_i32_0 = arith.constant 0 : i32
    %c0_i32_1 = arith.constant 0 : i32
    return %c0_i32, %c0_i32_0 : i32, i32
  }
  func.func @transform_9(%arg0: i32) -> (i32, i32) {
    %c0_i32 = arith.constant 0 : i32
    %c0_i32_0 = arith.constant 0 : i32
    %c0_i32_1 = arith.constant 0 : i32
    return %c0_i32, %c0_i32_0 : i32, i32
  }
  func.func @transform_10(%arg0: i32) -> (i32, i32) {
    %c0_i32 = arith.constant 0 : i32
    %c0_i32_0 = arith.constant 0 : i32
    %c0_i32_1 = arith.constant 0 : i32
    return %c0_i32, %c0_i32_0 : i32, i32
  }
  func.func @transform_11(%arg0: i32) -> (i32, i32) {
    %c0_i32 = arith.constant 0 : i32
    %c0_i32_0 = arith.constant 0 : i32
    %c0_i32_1 = arith.constant 0 : i32
    return %c0_i32, %c0_i32_0 : i32, i32
  }
  func.func @transform_12(%arg0: i32) -> (i32, i32, i32) {
    %c0_i32 = arith.constant 0 : i32
    %c0_i32_0 = arith.constant 0 : i32
    %c0_i32_1 = arith.constant 0 : i32
    return %arg0, %c0_i32, %c0_i32_0 : i32, i32, i32
  }
}

</mosaic_0001>

<llo_original>
// kernel: tpu_custom_call.1
$region0: #{tpu_custom_call.1}
  #allocation0 [shape = 'u32[]', space=smem, size = 0x4, offset = 0x4, fixed_abs, tag = 'smem constant byte address 0x4 - core index']
  #allocation1 [shape = 'u32[72,128]{1,0:T(1,128)}', space=vmem, size = 0x9000, scoped, tag = 'internal scratch']
  %s0 = inlined_call_operand.vmem [shape: f32[2,8,32], index: 0, kind: input, shape index: {}]
  %s1 = inlined_call_operand.vmem [shape: f32[8,4], index: 1, kind: input, shape index: {}]
  %s2 = inlined_call_operand.vmem [shape: f32[8,4], index: 2, kind: input, shape index: {}]
  %s3 = inlined_call_operand.vmem [shape: bf16[32,32], index: 3, kind: input, shape index: {}]
  %s4 = inlined_call_operand.vmem [shape: bf16[32,32], index: 4, kind: input, shape index: {}]
  %s5 = inlined_call_operand.vmem [shape: bf16[32,32], index: 5, kind: input, shape index: {}]
  %s6 = inlined_call_operand.vmem [shape: bf16[32,32], index: 6, kind: input, shape index: {}]
  %s7 = inlined_call_operand.hbm [shape: bf16[32,128], index: 7, kind: input, shape index: {}]
  %s8 = inlined_call_operand.hbm [shape: bf16[32,128], index: 8, kind: input, shape index: {}]
  %s9 = inlined_call_operand.vmem [shape: bf16[128,32], index: 9, kind: input, shape index: {}]
  %s10 = inlined_call_operand.vmem [shape: f32[1,32], index: 10, kind: input, shape index: {}]
  %s11 = inlined_call_operand.vmem [shape: f32[1,32], index: 11, kind: input, shape index: {}]
  %s12 = inlined_call_operand.hbm [shape: f32[2,8,32], index: 12, kind: output, shape index: {}]
  %s13 = sld [smem:[#allocation0]]
  $region89: #{tpu_custom_call.1} parent=0
    _
  %s15 = ssub.s32 1, %s13
  %s16 = scalar_select 0, %s15, %s13
  $region1: #{tpu_custom_call.1} parent=0
    #allocation2 [shape = 'u8[8192]{0}', space=vmem, size = 0x2000, scoped, tag = 'input window, operand 7, single buffered']
    #allocation3 [shape = 's32[2]{0}', space=sflag, size = 0x8, scoped, tag = 'scoped memory for tpu_custom_call.1']
    #allocation4 [shape = 's32[2]{0}', space=sflag, size = 0x8, scoped, tag = 'scoped memory for tpu_custom_call.1']
    #allocation5 [shape = 'u8[8192]{0}', space=vmem, size = 0x2000, scoped, tag = 'input window, operand 8, single buffered']
    #allocation6 [shape = 's32[1]{0}', space=sflag, size = 0x4, scoped, tag = 'scoped memory for tpu_custom_call.1']
    #allocation7 [shape = 'u8[8192]{0}', space=vmem, size = 0x2000, scoped, tag = 'output window, operand 0']
    %17 = vsyncpa [#allocation3], 0
    %18 = vsyncpa [#allocation6], 0
    %19 = vsyncpa [#allocation4], 0
    %s20 = scalar_lea.sflag [#allocation4], 1
    %21 = vsyncpa %s20, 0
    loop: start=0, step=1, limit=4
    $region2: #{tpu_custom_call.1} parent=1 // loop_pre_header
      _
    $region3: #{tpu_custom_call.1} parent=1 // loop_header
      %s23 = sphi 0, %s27
      %p24 = scmp.ge.s32.totalorder %s23, 4
      %s33 = sphi 0, %s35
      %s36 = sphi 0, %s33
      %s37 = sphi 0, %s36
      %s53 = sphi 0, %s37
      %s57 = sphi 0, %s57
      %s59 = sphi 0, %s57
      %s60 = sphi 0, %s59
      %s74 = sphi 0, %s60
      %s78 = sphi 0, %s78
      %s80 = sphi 0, %s78
      %s81 = sphi 0, %s80
      %s95 = sphi 0, %s81
      %s99 = sphi 0, %s99
      %s101 = sphi 0, %s99
      %s102 = sphi 0, %s101
      %s116 = sphi 0, %s102
      %s120 = sphi 0, %s120
      %s122 = sphi 0, %s120
      %s123 = sphi 0, %s122
      %s137 = sphi 0, %s123
      %s141 = sphi 0, %s141
      %s143 = sphi 0, %s141
      %s144 = sphi 0, %s143
      %s158 = sphi 0, %s144
      %s162 = sphi 0, %s162
      %s164 = sphi 0, %s162
      %s165 = sphi 0, %s164
      %s179 = sphi 0, %s165
      %s183 = sphi 0, %s183
      %s185 = sphi 0, %s183
      %s186 = sphi 0, %s185
      %s200 = sphi 0, %s186
      %s204 = sphi 0, %s204
      %s206 = sphi 0, %s204
      %s207 = sphi 0, %s206
      %s221 = sphi 0, %s207
      %s225 = sphi 0, %s225
      %s227 = sphi 0, %s225
      %s228 = sphi 0, %s227
      %s242 = sphi 0, %s228
      %s246 = sphi 0, %s246
      %s248 = sphi 0, %s246
      %s249 = sphi 0, %s248
      %s263 = sphi 0, %s249
      %s267 = sphi 0, %s267
      %s269 = sphi 0, %s267
      %s270 = sphi 0, %s269
      %s284 = sphi 0, %s270
      %s290 = sphi 0, %s292
      %s293 = sphi 0, %s290
      %s294 = sphi 0, %s293
      %s310 = sphi 0, %s294
    $region4: #{tpu_custom_call.1} parent=1 // loop_header_branch
      %26 = sbr.rel (%p24) target = $region8
    $region5: #{tpu_custom_call.1} parent=1 // loop_body
      %s28 = ssub.s32 %s23, 1
      %s29 = ssub.s32 %s23, 2
      %s30 = sadd.s32 %s23, 1
      %s31 = ssub.s32 %s23, %s30
      %p32 = scmp.eq.s32.totalorder %s31, 0
      %s34 = sadd.s32 %s33, 1
      %s35 = scalar_select %p32, %s33, %s34
      %p38 = pneg %p32
      %p39 = scmp.eq.s32.totalorder %s23, 1
      %p40 = por %p38, %p39
      %p41 = scmp.ne.s32.totalorder %s33, %s36
      %p42 = scmp.eq.s32.totalorder %s23, 0
      %p43 = por %p41, %p42
      %p44 = scmp.ne.s32.totalorder %s33, %s36
      %p45 = scmp.eq.s32.totalorder %s28, 1
      %p46 = por %p44, %p45
      %p47 = scmp.ne.s32.totalorder %s36, %s37
      %p48 = scmp.eq.s32.totalorder %s28, 0
      %p49 = por %p47, %p48
      %p50 = scmp.ne.s32.totalorder %s36, %s37
      %p51 = scmp.eq.s32.totalorder %s29, 1
      %p52 = por %p50, %p51
      %p54 = scmp.ne.s32.totalorder %s37, %s53
      %p55 = scmp.eq.s32.totalorder %s29, 0
      %p56 = por %p54, %p55
      %s58 = sadd.s32 %s57, 1
      %p61 = scmp.eq.s32.totalorder %s23, 1
      %p62 = scmp.ne.s32.totalorder %s57, %s59
      %p63 = scmp.eq.s32.totalorder %s23, 0
      %p64 = por %p62, %p63
      %p65 = scmp.ne.s32.totalorder %s57, %s59
      %p66 = scmp.eq.s32.totalorder %s28, 1
      %p67 = por %p65, %p66
      %p68 = scmp.ne.s32.totalorder %s59, %s60
      %p69 = scmp.eq.s32.totalorder %s28, 0
      %p70 = por %p68, %p69
      %p71 = scmp.ne.s32.totalorder %s59, %s60
      %p72 = scmp.eq.s32.totalorder %s29, 1
      %p73 = por %p71, %p72
      %p75 = scmp.ne.s32.totalorder %s60, %s74
      %p76 = scmp.eq.s32.totalorder %s29, 0
      %p77 = por %p75, %p76
      %s79 = sadd.s32 %s78, 1
      %p82 = scmp.eq.s32.totalorder %s23, 1
      %p83 = scmp.ne.s32.totalorder %s78, %s80
      %p84 = scmp.eq.s32.totalorder %s23, 0
      %p85 = por %p83, %p84
      %p86 = scmp.ne.s32.totalorder %s78, %s80
      %p87 = scmp.eq.s32.totalorder %s28, 1
      %p88 = por %p86, %p87
      %p89 = scmp.ne.s32.totalorder %s80, %s81
      %p90 = scmp.eq.s32.totalorder %s28, 0
      %p91 = por %p89, %p90
      %p92 = scmp.ne.s32.totalorder %s80, %s81
      %p93 = scmp.eq.s32.totalorder %s29, 1
      %p94 = por %p92, %p93
      %p96 = scmp.ne.s32.totalorder %s81, %s95
      %p97 = scmp.eq.s32.totalorder %s29, 0
      %p98 = por %p96, %p97
      %s100 = sadd.s32 %s99, 1
      %p103 = scmp.eq.s32.totalorder %s23, 1
      %p104 = scmp.ne.s32.totalorder %s99, %s101
      %p105 = scmp.eq.s32.totalorder %s23, 0
      %p106 = por %p104, %p105
      %p107 = scmp.ne.s32.totalorder %s99, %s101
      %p108 = scmp.eq.s32.totalorder %s28, 1
      %p109 = por %p107, %p108
      %p110 = scmp.ne.s32.totalorder %s101, %s102
      %p111 = scmp.eq.s32.totalorder %s28, 0
      %p112 = por %p110, %p111
      %p113 = scmp.ne.s32.totalorder %s101, %s102
      %p114 = scmp.eq.s32.totalorder %s29, 1
      %p115 = por %p113, %p114
      %p117 = scmp.ne.s32.totalorder %s102, %s116
      %p118 = scmp.eq.s32.totalorder %s29, 0
      %p119 = por %p117, %p118
      %s121 = sadd.s32 %s120, 1
      %p124 = scmp.eq.s32.totalorder %s23, 1
      %p125 = scmp.ne.s32.totalorder %s120, %s122
      %p126 = scmp.eq.s32.totalorder %s23, 0
      %p127 = por %p125, %p126
      %p128 = scmp.ne.s32.totalorder %s120, %s122
      %p129 = scmp.eq.s32.totalorder %s28, 1
      %p130 = por %p128, %p129
      %p131 = scmp.ne.s32.totalorder %s122, %s123
      %p132 = scmp.eq.s32.totalorder %s28, 0
      %p133 = por %p131, %p132
      %p134 = scmp.ne.s32.totalorder %s122, %s123
      %p135 = scmp.eq.s32.totalorder %s29, 1
      %p136 = por %p134, %p135
      %p138 = scmp.ne.s32.totalorder %s123, %s137
      %p139 = scmp.eq.s32.totalorder %s29, 0
      %p140 = por %p138, %p139
      %s142 = sadd.s32 %s141, 1
      %p145 = scmp.eq.s32.totalorder %s23, 1
      %p146 = scmp.ne.s32.totalorder %s141, %s143
      %p147 = scmp.eq.s32.totalorder %s23, 0
      %p148 = por %p146, %p147
      %p149 = scmp.ne.s32.totalorder %s141, %s143
      %p150 = scmp.eq.s32.totalorder %s28, 1
      %p151 = por %p149, %p150
      %p152 = scmp.ne.s32.totalorder %s143, %s144
      %p153 = scmp.eq.s32.totalorder %s28, 0
      %p154 = por %p152, %p153
      %p155 = scmp.ne.s32.totalorder %s143, %s144
      %p156 = scmp.eq.s32.totalorder %s29, 1
      %p157 = por %p155, %p156
      %p159 = scmp.ne.s32.totalorder %s144, %s158
      %p160 = scmp.eq.s32.totalorder %s29, 0
      %p161 = por %p159, %p160
      %s163 = sadd.s32 %s162, 1
      %p166 = scmp.eq.s32.totalorder %s23, 1
      %p167 = scmp.ne.s32.totalorder %s162, %s164
      %p168 = scmp.eq.s32.totalorder %s23, 0
      %p169 = por %p167, %p168
      %p170 = scmp.ne.s32.totalorder %s162, %s164
      %p171 = scmp.eq.s32.totalorder %s28, 1
      %p172 = por %p170, %p171
      %p173 = scmp.ne.s32.totalorder %s164, %s165
      %p174 = scmp.eq.s32.totalorder %s28, 0
      %p175 = por %p173, %p174
      %p176 = scmp.ne.s32.totalorder %s164, %s165
      %p177 = scmp.eq.s32.totalorder %s29, 1
      %p178 = por %p176, %p177
      %p180 = scmp.ne.s32.totalorder %s165, %s179
      %p181 = scmp.eq.s32.totalorder %s29, 0
      %p182 = por %p180, %p181
      %s184 = sadd.s32 %s183, 1
      %p187 = scmp.eq.s32.totalorder %s23, 1
      %p188 = scmp.ne.s32.totalorder %s183, %s185
      %p189 = scmp.eq.s32.totalorder %s23, 0
      %p190 = por %p188, %p189
      %p191 = scmp.ne.s32.totalorder %s183, %s185
      %p192 = scmp.eq.s32.totalorder %s28, 1
      %p193 = por %p191, %p192
      %p194 = scmp.ne.s32.totalorder %s185, %s186
      %p195 = scmp.eq.s32.totalorder %s28, 0
      %p196 = por %p194, %p195
      %p197 = scmp.ne.s32.totalorder %s185, %s186
      %p198 = scmp.eq.s32.totalorder %s29, 1
      %p199 = por %p197, %p198
      %p201 = scmp.ne.s32.totalorder %s186, %s200
      %p202 = scmp.eq.s32.totalorder %s29, 0
      %p203 = por %p201, %p202
      %s205 = sadd.s32 %s204, 1
      %p208 = scmp.eq.s32.totalorder %s23, 1
      %p209 = scmp.ne.s32.totalorder %s204, %s206
      %p210 = scmp.eq.s32.totalorder %s23, 0
      %p211 = por %p209, %p210
      %p212 = scmp.ne.s32.totalorder %s204, %s206
      %p213 = scmp.eq.s32.totalorder %s28, 1
      %p214 = por %p212, %p213
      %p215 = scmp.ne.s32.totalorder %s206, %s207
      %p216 = scmp.eq.s32.totalorder %s28, 0
      %p217 = por %p215, %p216
      %p218 = scmp.ne.s32.totalorder %s206, %s207
      %p219 = scmp.eq.s32.totalorder %s29, 1
      %p220 = por %p218, %p219
      %p222 = scmp.ne.s32.totalorder %s207, %s221
      %p223 = scmp.eq.s32.totalorder %s29, 0
      %p224 = por %p222, %p223
      %s226 = sadd.s32 %s225, 1
      %p229 = scmp.eq.s32.totalorder %s23, 1
      %p230 = scmp.ne.s32.totalorder %s225, %s227
      %p231 = scmp.eq.s32.totalorder %s23, 0
      %p232 = por %p230, %p231
      %p233 = scmp.ne.s32.totalorder %s225, %s227
      %p234 = scmp.eq.s32.totalorder %s28, 1
      %p235 = por %p233, %p234
      %p236 = scmp.ne.s32.totalorder %s227, %s228
      %p237 = scmp.eq.s32.totalorder %s28, 0
      %p238 = por %p236, %p237
      %p239 = scmp.ne.s32.totalorder %s227, %s228
      %p240 = scmp.eq.s32.totalorder %s29, 1
      %p241 = por %p239, %p240
      %p243 = scmp.ne.s32.totalorder %s228, %s242
      %p244 = scmp.eq.s32.totalorder %s29, 0
      %p245 = por %p243, %p244
      %s247 = sadd.s32 %s246, 1
      %p250 = scmp.eq.s32.totalorder %s23, 1
      %p251 = scmp.ne.s32.totalorder %s246, %s248
      %p252 = scmp.eq.s32.totalorder %s23, 0
      %p253 = por %p251, %p252
      %p254 = scmp.ne.s32.totalorder %s246, %s248
      %p255 = scmp.eq.s32.totalorder %s28, 1
      %p256 = por %p254, %p255
      %p257 = scmp.ne.s32.totalorder %s248, %s249
      %p258 = scmp.eq.s32.totalorder %s28, 0
      %p259 = por %p257, %p258
      %p260 = scmp.ne.s32.totalorder %s248, %s249
      %p261 = scmp.eq.s32.totalorder %s29, 1
      %p262 = por %p260, %p261
      %p264 = scmp.ne.s32.totalorder %s249, %s263
      %p265 = scmp.eq.s32.totalorder %s29, 0
      %p266 = por %p264, %p265
      %s268 = sadd.s32 %s267, 1
      %p271 = scmp.eq.s32.totalorder %s23, 1
      %p272 = scmp.ne.s32.totalorder %s267, %s269
      %p273 = scmp.eq.s32.totalorder %s23, 0
      %p274 = por %p272, %p273
      %p275 = scmp.ne.s32.totalorder %s267, %s269
      %p276 = scmp.eq.s32.totalorder %s28, 1
      %p277 = por %p275, %p276
      %p278 = scmp.ne.s32.totalorder %s269, %s270
      %p279 = scmp.eq.s32.totalorder %s28, 0
      %p280 = por %p278, %p279
      %p281 = scmp.ne.s32.totalorder %s269, %s270
      %p282 = scmp.eq.s32.totalorder %s29, 1
      %p283 = por %p281, %p282
      %p285 = scmp.ne.s32.totalorder %s270, %s284
      %p286 = scmp.eq.s32.totalorder %s29, 0
      %p287 = por %p285, %p286
      %s288 = ssub.s32 %s23, %s30
      %p289 = scmp.eq.s32.totalorder %s288, 0
      %s291 = sadd.s32 %s290, 1
      %s292 = scalar_select %p289, %s290, %s291
      %p295 = pneg %p289
      %p296 = scmp.eq.s32.totalorder %s23, 1
      %p297 = por %p295, %p296
      %p298 = scmp.ne.s32.totalorder %s290, %s293
      %p299 = scmp.eq.s32.totalorder %s23, 0
      %p300 = por %p298, %p299
      %p301 = scmp.ne.s32.totalorder %s290, %s293
      %p302 = scmp.eq.s32.totalorder %s28, 1
      %p303 = por %p301, %p302
      %p304 = scmp.ne.s32.totalorder %s293, %s294
      %p305 = scmp.eq.s32.totalorder %s28, 0
      %p306 = por %p304, %p305
      %p307 = scmp.ne.s32.totalorder %s293, %s294
      %p308 = scmp.eq.s32.totalorder %s29, 1
      %p309 = por %p307, %p308
      %p311 = scmp.ne.s32.totalorder %s294, %s310
      %p312 = scmp.eq.s32.totalorder %s29, 0
      %p313 = por %p311, %p312
      %p314 = scmp.le.s32.totalorder 1, %s23
      %p315 = scmp.lt.s32.totalorder %s23, 3
      %p316 = pnand %p314, %p315
      %p317 = pneg %p316
      // Predicated region
      $region9: #{tpu_custom_call.1} parent=5 // pred_check
        _
      $region10: #{tpu_custom_call.1} parent=5 // pred_check_branch
        %319 = sbr.rel (%p316) target = $region12
      $region11: #{tpu_custom_call.1} parent=5 // pred_region
        %s320 = ssub.s32 %s23, 1
        // Predicated region
        $region13: #{tpu_custom_call.1} parent=11 // pred_check
          %p321 = pneg %p70
        $region14: #{tpu_custom_call.1} parent=11 // pred_check_branch
          %323 = sbr.rel (%p321) target = $region16
        $region15: #{tpu_custom_call.1} parent=11 // pred_region
          _
        $region16: #{tpu_custom_call.1} parent=11 // pred_fallthru
          _
        // Predicated region
        $region17: #{tpu_custom_call.1} parent=11 // pred_check
          %p324 = pneg %p91
        $region18: #{tpu_custom_call.1} parent=11 // pred_check_branch
          %326 = sbr.rel (%p324) target = $region20
        $region19: #{tpu_custom_call.1} parent=11 // pred_region
          _
        $region20: #{tpu_custom_call.1} parent=11 // pred_fallthru
          _
        // Predicated region
        $region21: #{tpu_custom_call.1} parent=11 // pred_check
          %p327 = pneg %p112
        $region22: #{tpu_custom_call.1} parent=11 // pred_check_branch
          %329 = sbr.rel (%p327) target = $region24
        $region23: #{tpu_custom_call.1} parent=11 // pred_region
          _
        $region24: #{tpu_custom_call.1} parent=11 // pred_fallthru
          _
        // Predicated region
        $region25: #{tpu_custom_call.1} parent=11 // pred_check
          %p330 = pneg %p133
        $region26: #{tpu_custom_call.1} parent=11 // pred_check_branch
          %332 = sbr.rel (%p330) target = $region28
        $region27: #{tpu_custom_call.1} parent=11 // pred_region
          _
        $region28: #{tpu_custom_call.1} parent=11 // pred_fallthru
          _
        // Predicated region
        $region29: #{tpu_custom_call.1} parent=11 // pred_check
          %p333 = pneg %p154
        $region30: #{tpu_custom_call.1} parent=11 // pred_check_branch
          %335 = sbr.rel (%p333) target = $region32
        $region31: #{tpu_custom_call.1} parent=11 // pred_region
          _
        $region32: #{tpu_custom_call.1} parent=11 // pred_fallthru
          _
        // Predicated region
        $region33: #{tpu_custom_call.1} parent=11 // pred_check
          %p336 = pneg %p175
        $region34: #{tpu_custom_call.1} parent=11 // pred_check_branch
          %338 = sbr.rel (%p336) target = $region36
        $region35: #{tpu_custom_call.1} parent=11 // pred_region
          _
        $region36: #{tpu_custom_call.1} parent=11 // pred_fallthru
          _
        // Predicated region
        $region37: #{tpu_custom_call.1} parent=11 // pred_check
          %p339 = pneg %p196
        $region38: #{tpu_custom_call.1} parent=11 // pred_check_branch
          %341 = sbr.rel (%p339) target = $region40
        $region39: #{tpu_custom_call.1} parent=11 // pred_region
          %343 = vsyncadd [#allocation3], 0
          %s344 = sshll.u32 %s7, 4
          %s345 = int_to_ptr.hbm [resolvable:$true] %s344
          %s346 = sshll.u32 [#allocation2], 4
          %s347 = int_to_ptr.vmem [resolvable:$true] %s346
          %352 = dma.hbm_to_vmem [thread:$0]  %s345, 256, %s347, [#allocation3], 64, 64, 4
        $region40: #{tpu_custom_call.1} parent=11 // pred_fallthru
          _
        // Predicated region
        $region41: #{tpu_custom_call.1} parent=11 // pred_check
          %p353 = pneg %p217
        $region42: #{tpu_custom_call.1} parent=11 // pred_check_branch
          %355 = sbr.rel (%p353) target = $region44
        $region43: #{tpu_custom_call.1} parent=11 // pred_region
          %357 = vsyncadd [#allocation6], 0
          %s358 = sshll.u32 %s8, 4
          %s359 = int_to_ptr.hbm [resolvable:$true] %s358
          %s360 = sshll.u32 [#allocation5], 4
          %s361 = int_to_ptr.vmem [resolvable:$true] %s360
          %366 = dma.hbm_to_vmem [thread:$0]  %s359, 256, %s361, [#allocation6], 64, 64, 4
        $region44: #{tpu_custom_call.1} parent=11 // pred_fallthru
          _
        // Predicated region
        $region45: #{tpu_custom_call.1} parent=11 // pred_check
          %p367 = pneg %p238
        $region46: #{tpu_custom_call.1} parent=11 // pred_check_branch
          %369 = sbr.rel (%p367) target = $region48
        $region47: #{tpu_custom_call.1} parent=11 // pred_region
          _
        $region48: #{tpu_custom_call.1} parent=11 // pred_fallthru
          _
        // Predicated region
        $region49: #{tpu_custom_call.1} parent=11 // pred_check
          %p370 = pneg %p259
        $region50: #{tpu_custom_call.1} parent=11 // pred_check_branch
          %372 = sbr.rel (%p370) target = $region52
        $region51: #{tpu_custom_call.1} parent=11 // pred_region
          _
        $region52: #{tpu_custom_call.1} parent=11 // pred_fallthru
          _
        // Predicated region
        $region53: #{tpu_custom_call.1} parent=11 // pred_check
          %p373 = pneg %p280
        $region54: #{tpu_custom_call.1} parent=11 // pred_check_branch
          %375 = sbr.rel (%p373) target = $region56
        $region55: #{tpu_custom_call.1} parent=11 // pred_region
          _
        $region56: #{tpu_custom_call.1} parent=11 // pred_fallthru
          _
      $region12: #{tpu_custom_call.1} parent=5 // pred_fallthru
        _
      %p376 = scmp.lt.s32.totalorder %s23, 2
      // Predicated region
      $region57: #{tpu_custom_call.1} parent=5 // pred_check
        %p377 = pneg %p376
      $region58: #{tpu_custom_call.1} parent=5 // pred_check_branch
        %379 = sbr.rel (%p377) target = $region60
      $region59: #{tpu_custom_call.1} parent=5 // pred_region
        // Predicated region
        $region61: #{tpu_custom_call.1} parent=59 // pred_check
          %p380 = pneg %p43
        $region62: #{tpu_custom_call.1} parent=59 // pred_check_branch
          %382 = sbr.rel (%p380) target = $region64
        $region63: #{tpu_custom_call.1} parent=59 // pred_region
          %p383 = scmp.lt.s32.totalorder %s23, 1
          %s384 = scalar_select %p383, %s23, 1
          %s385 = smul.addr %s384, 8
          %s386 = scalar_lea.vmem %s0, %s385
        $region64: #{tpu_custom_call.1} parent=59 // pred_fallthru
          _
      $region60: #{tpu_custom_call.1} parent=5 // pred_fallthru
        _
      %p387 = scmp.le.s32.totalorder 1, %s23
      %p388 = scmp.lt.s32.totalorder %s23, 3
      %p389 = pnand %p387, %p388
      %p390 = pneg %p389
      // Predicated region
      $region65: #{tpu_custom_call.1} parent=5 // pred_check
        _
      $region66: #{tpu_custom_call.1} parent=5 // pred_check_branch
        %392 = sbr.rel (%p389) target = $region68
      $region67: #{tpu_custom_call.1} parent=5 // pred_region
        %s393 = ssub.s32 %s23, 1
        // Predicated region
        $region69: #{tpu_custom_call.1} parent=67 // pred_check
          %p394 = pneg %p196
        $region70: #{tpu_custom_call.1} parent=67 // pred_check_branch
          %396 = sbr.rel (%p394) target = $region72
        $region71: #{tpu_custom_call.1} parent=67 // pred_region
          %398 = dma.done [#allocation3], 256
        $region72: #{tpu_custom_call.1} parent=67 // pred_fallthru
          _
        // Predicated region
        $region73: #{tpu_custom_call.1} parent=67 // pred_check
          %p399 = pneg %p217
        $region74: #{tpu_custom_call.1} parent=67 // pred_check_branch
          %401 = sbr.rel (%p399) target = $region76
        $region75: #{tpu_custom_call.1} parent=67 // pred_region
          %403 = dma.done [#allocation6], 256
        $region76: #{tpu_custom_call.1} parent=67 // pred_fallthru
          _
        %p404 = scmp.lt.s32.totalorder %s28, 1
        %s405 = scalar_select %p404, %s28, 1
        %s406 = smul.addr %s405, 8
        %s407 = scalar_lea.vmem %s0, %s406
        %p408 = pneg %p49
        %p409 = pneg %p46
        %p410 = pneg %p70
        %p411 = pneg %p67
        %p412 = pneg %p91
        %p413 = pneg %p88
        %p414 = pneg %p112
        %p415 = pneg %p109
        %p416 = pneg %p133
        %p417 = pneg %p130
        %p418 = pneg %p154
        %p419 = pneg %p151
        %p420 = pneg %p175
        %p421 = pneg %p172
        %p422 = pneg %p196
        %p423 = pneg %p193
        %p424 = pneg %p217
        %p425 = pneg %p214
        %p426 = pneg %p238
        %p427 = pneg %p235
        %p428 = pneg %p259
        %p429 = pneg %p256
        %p430 = pneg %p280
        %p431 = pneg %p277
        %p432 = pneg %p306
        %p433 = pneg %p303
        %s434 = sand.u32 %s293, 1
        %s435 = scalar_lea.sflag [#allocation4], %s434
        %s436 = sand.u32 %s293, 1
        %s437 = smul.addr %s436, 8
        %s438 = scalar_lea.vmem [#allocation7], %s437
        %p439 = scmp.lt.s32.totalorder %s28, 1
        %s440 = scalar_select %p439, %s28, 1
        %s441 = smul.addr %s440, 8
        %s442 = scalar_lea.vmem %s0, %s441
        %v444 = vld [vmem:[%s442] sm:$0xff]
        %v445 = vld [vmem:[%s10] sm:$0x1]
        %v446 = vmul.f32 %v444, %v444
        %vm447 = vcmask 261120
        %v448 = vsel %vm447, %v446, 0.0
        %449 = vadd.xlane.f32.xlu0 %v448
        %v450 = vpop.xlane.xlu0 %449
        %v451 = vrcp.pop 32.0
        %v452 = vmul.f32 32.0, %v451
        %v453 = vsub.f32 1.0, %v452
        %v454 = vmul.f32 %v451, %v453
        %v455 = vadd.f32 %v451, %v454
        %vm456 = vweird.f32 %v451
        %v457 = vsel %vm456, %v451, %v455
        %v458 = vmul.f32 %v450, %v457
        %v459 = vadd.f32 %v458, 1e-06
        %v460 = vrsqrt.pop %v459
        %v461 = vmul.f32 %v460, %v459
        %v462 = vmul.f32 %v461, %v460
        %v463 = vmul.f32 0.5, %v462
        %v464 = vsub.f32 1.5, %v463
        %v465 = vmul.f32 %v460, %v464
        %vm466 = vweird.f32 %v459
        %vm467 = vweird.f32 %v460
        %vm468 = vmor %vm466, %vm467
        %v469 = vsel %vm468, %v460, %v465
        %v470 = vmul.f32 %v444, %v469
        %v472 = vperm.slane %v445, 0
        %v474 = vmul.f32 %v470, %v472
        %v475 = vpack.c.bf16 %v474, %v474
        %v476 = vld [vmem:[%s3] sm:$0xf]
        %v477 = vld [vmem:[%s3 + $0x4] sm:$0xf]
        %v478 = vld [vmem:[%s3 + $0x8] sm:$0xf]
        %v479 = vld [vmem:[%s3 + $0xc] sm:$0xf]
        %v484 = vunpack.c.l.b16 %v476
        %v485 = vunpack.c.l.b16 %v477
        %v486 = vunpack.c.l.b16 %v478
        %v487 = vunpack.c.l.b16 %v479
        %v488 = vpack.c.b16 %v485, %v484
        %v489 = vpack.c.b16 %v487, %v486
        %v493 = vsel %vm447, %v475, 0
        %495 = vmatpush.bf16.msra.mxu0 0
        %496 = vmatpush.bf16.msra.mxu0 0
        %497 = vmatpush.bf16.msra.mxu0 0
        %498 = vmatpush.bf16.msra.mxu0 0
        %499 = vmatpush.bf16.msra.mxu0 0
        %500 = vmatpush.bf16.msra.mxu0 0
        %501 = vmatpush.bf16.msra.mxu0 %v489
        %502 = vmatpush.bf16.msra.mxu0 %v488
        %503 = vmatmul.bf16.gmra.mxu0 %v493
        %v504 = vpop.f32.mrf.mxu0
        %v505 = vadd.f32 0.0, %v504
        %v506 = vpop.f32.mrf.mxu0
        %507 = vdwg.mxu0
        %v508 = vld [vmem:[%s4] sm:$0xf]
        %v509 = vld [vmem:[%s4 + $0x4] sm:$0xf]
        %v510 = vld [vmem:[%s4 + $0x8] sm:$0xf]
        %v511 = vld [vmem:[%s4 + $0xc] sm:$0xf]
        %v516 = vunpack.c.l.b16 %v508
        %v517 = vunpack.c.l.b16 %v509
        %v518 = vunpack.c.l.b16 %v510
        %v519 = vunpack.c.l.b16 %v511
        %v520 = vpack.c.b16 %v517, %v516
        %v521 = vpack.c.b16 %v519, %v518
        %524 = vmatpush.bf16.msra.mxu0 0
        %525 = vmatpush.bf16.msra.mxu0 0
        %526 = vmatpush.bf16.msra.mxu0 0
        %527 = vmatpush.bf16.msra.mxu0 0
        %528 = vmatpush.bf16.msra.mxu0 0
        %529 = vmatpush.bf16.msra.mxu0 0
        %530 = vmatpush.bf16.msra.mxu0 %v521
        %531 = vmatpush.bf16.msra.mxu0 %v520
        %532 = vmatmul.bf16.gmra.mxu0 %v493
        %v533 = vpop.f32.mrf.mxu0
        %v534 = vadd.f32 0.0, %v533
        %v535 = vpop.f32.mrf.mxu0
        %536 = vdwg.mxu0
        %v537 = vld [vmem:[%s5] sm:$0xf]
        %v538 = vld [vmem:[%s5 + $0x4] sm:$0xf]
        %v539 = vld [vmem:[%s5 + $0x8] sm:$0xf]
        %v540 = vld [vmem:[%s5 + $0xc] sm:$0xf]
        %v545 = vunpack.c.l.b16 %v537
        %v546 = vunpack.c.l.b16 %v538
        %v547 = vunpack.c.l.b16 %v539
        %v548 = vunpack.c.l.b16 %v540
        %v549 = vpack.c.b16 %v546, %v545
        %v550 = vpack.c.b16 %v548, %v547
        %553 = vmatpush.bf16.msra.mxu0 0
        %554 = vmatpush.bf16.msra.mxu0 0
        %555 = vmatpush.bf16.msra.mxu0 0
        %556 = vmatpush.bf16.msra.mxu0 0
        %557 = vmatpush.bf16.msra.mxu0 0
        %558 = vmatpush.bf16.msra.mxu0 0
        %559 = vmatpush.bf16.msra.mxu0 %v550
        %560 = vmatpush.bf16.msra.mxu0 %v549
        %561 = vmatmul.bf16.gmra.mxu0 %v493
        %v562 = vpop.f32.mrf.mxu0
        %v563 = vadd.f32 0.0, %v562
        %v564 = vpop.f32.mrf.mxu0
        %565 = vdwg.mxu0
        %567 = vrot.lane.b32.xlu0 %v505, 120
        %v568 = vpop.permute.xlu0 %567
        %570 = vrot.lane.b32.xlu0 %v505, 112
        %v571 = vpop.permute.xlu0 %570
        %573 = vrot.lane.b32.xlu0 %v505, 104
        %v574 = vpop.permute.xlu0 %573
        %577 = vrot.lane.b32.xlu0 %v534, 120
        %v578 = vpop.permute.xlu0 %577
        %580 = vrot.lane.b32.xlu0 %v534, 112
        %v581 = vpop.permute.xlu0 %580
        %583 = vrot.lane.b32.xlu0 %v534, 104
        %v584 = vpop.permute.xlu0 %583
        %587 = vrot.lane.b32.xlu0 %v563, 120
        %v588 = vpop.permute.xlu0 %587
        %590 = vrot.lane.b32.xlu0 %v563, 112
        %v591 = vpop.permute.xlu0 %590
        %593 = vrot.lane.b32.xlu0 %v563, 104
        %v594 = vpop.permute.xlu0 %593
        %v596 = vpack.c.bf16 %v563, %v563
        %v597 = vpack.c.bf16 %v588, %v588
        %v598 = vpack.c.bf16 %v591, %v591
        %v599 = vpack.c.bf16 %v594, %v594
        %v600 = vld [vmem:[%s1] sm:$0xff]
        %v601 = vld [vmem:[%s2] sm:$0xff]
        %v602 = vmul.f32 %v505, %v600
        %v603 = vmul.f32 %v568, %v600
        %v604 = vmul.f32 %v571, %v600
        %v605 = vmul.f32 %v574, %v600
        %607 = vrot.lane.b32.xlu0 %v601, 4
        %v608 = vpop.permute.xlu0 %607
        %v610 = vmul.f32 %v505, %v608
        %v611 = vmul.f32 %v568, %v608
        %v612 = vmul.f32 %v571, %v608
        %v613 = vmul.f32 %v574, %v608
        %618 = vrot.lane.b32.xlu0 %v610, 124
        %v619 = vpop.permute.xlu0 %618
        %620 = vrot.lane.b32.xlu0 %v611, 124
        %v621 = vpop.permute.xlu0 %620
        %622 = vrot.lane.b32.xlu0 %v612, 124
        %v623 = vpop.permute.xlu0 %622
        %624 = vrot.lane.b32.xlu0 %v613, 124
        %v625 = vpop.permute.xlu0 %624
        %v630 = vsub.f32 %v602, %v619
        %v631 = vsub.f32 %v603, %v621
        %v632 = vsub.f32 %v604, %v623
        %v633 = vsub.f32 %v605, %v625
        %635 = vrot.lane.b32.xlu0 %v600, 4
        %v636 = vpop.permute.xlu0 %635
        %v638 = vmul.f32 %v505, %v636
        %v639 = vmul.f32 %v568, %v636
        %v640 = vmul.f32 %v571, %v636
        %v641 = vmul.f32 %v574, %v636
        %v642 = vmul.f32 %v505, %v601
        %v643 = vmul.f32 %v568, %v601
        %v644 = vmul.f32 %v571, %v601
        %v645 = vmul.f32 %v574, %v601
        %650 = vrot.lane.b32.xlu0 %v642, 4
        %v651 = vpop.permute.xlu0 %650
        %652 = vrot.lane.b32.xlu0 %v643, 4
        %v653 = vpop.permute.xlu0 %652
        %654 = vrot.lane.b32.xlu0 %v644, 4
        %v655 = vpop.permute.xlu0 %654
        %656 = vrot.lane.b32.xlu0 %v645, 4
        %v657 = vpop.permute.xlu0 %656
        %v662 = vadd.f32 %v638, %v651
        %v663 = vadd.f32 %v639, %v653
        %v664 = vadd.f32 %v640, %v655
        %v665 = vadd.f32 %v641, %v657
        %vm666 = vcmask 31744
        %v667 = vsel %vm666, %v630, %v662
        %v668 = vsel %vm666, %v631, %v663
        %v669 = vsel %vm666, %v632, %v664
        %v670 = vsel %vm666, %v633, %v665
        %v671 = vpack.c.bf16 %v667, %v667
        %v672 = vpack.c.bf16 %v668, %v668
        %v673 = vpack.c.bf16 %v669, %v669
        %v674 = vpack.c.bf16 %v670, %v670
        %v675 = vmul.f32 %v534, %v600
        %v676 = vmul.f32 %v578, %v600
        %v677 = vmul.f32 %v581, %v600
        %v678 = vmul.f32 %v584, %v600
        %v679 = vmul.f32 %v534, %v608
        %v680 = vmul.f32 %v578, %v608
        %v681 = vmul.f32 %v581, %v608
        %v682 = vmul.f32 %v584, %v608
        %687 = vrot.lane.b32.xlu0 %v679, 124
        %v688 = vpop.permute.xlu0 %687
        %689 = vrot.lane.b32.xlu0 %v680, 124
        %v690 = vpop.permute.xlu0 %689
        %691 = vrot.lane.b32.xlu0 %v681, 124
        %v692 = vpop.permute.xlu0 %691
        %693 = vrot.lane.b32.xlu0 %v682, 124
        %v694 = vpop.permute.xlu0 %693
        %v699 = vsub.f32 %v675, %v688
        %v700 = vsub.f32 %v676, %v690
        %v701 = vsub.f32 %v677, %v692
        %v702 = vsub.f32 %v678, %v694
        %v703 = vmul.f32 %v534, %v636
        %v704 = vmul.f32 %v578, %v636
        %v705 = vmul.f32 %v581, %v636
        %v706 = vmul.f32 %v584, %v636
        %v707 = vmul.f32 %v534, %v601
        %v708 = vmul.f32 %v578, %v601
        %v709 = vmul.f32 %v581, %v601
        %v710 = vmul.f32 %v584, %v601
        %715 = vrot.lane.b32.xlu0 %v707, 4
        %v716 = vpop.permute.xlu0 %715
        %717 = vrot.lane.b32.xlu0 %v708, 4
        %v718 = vpop.permute.xlu0 %717
        %719 = vrot.lane.b32.xlu0 %v709, 4
        %v720 = vpop.permute.xlu0 %719
        %721 = vrot.lane.b32.xlu0 %v710, 4
        %v722 = vpop.permute.xlu0 %721
        %v727 = vadd.f32 %v703, %v716
        %v728 = vadd.f32 %v704, %v718
        %v729 = vadd.f32 %v705, %v720
        %v730 = vadd.f32 %v706, %v722
        %v731 = vsel %vm666, %v699, %v727
        %v732 = vsel %vm666, %v700, %v728
        %v733 = vsel %vm666, %v701, %v729
        %v734 = vsel %vm666, %v702, %v730
        %v735 = vpack.c.bf16 %v731, %v731
        %v736 = vpack.c.bf16 %v732, %v732
        %v737 = vpack.c.bf16 %v733, %v733
        %v738 = vpack.c.bf16 %v734, %v734
        %v739 = vlaneseq
        %v740 = vshrl.u32 %v739, 7
        %v741 = vlaneseq
        %v742 = vand.u32 %v741, 127
        %vm743 = vcmp.le.s32.totalorder %v742, %v740
        %v744 = vsel %vm743, 0.0, -1e+09
        %vm745 = vcmask 64512
        %v747 = vsel %vm745, %v671, 0
        %v750 = vsel %vm745, %v735, 0
        %752 = vmatpush.bf16.xpose.msra.mxu0 0
        %753 = vmatpush.bf16.xpose.msra.mxu0 0
        %754 = vmatpush.bf16.xpose.msra.mxu0 0
        %755 = vmatpush.bf16.xpose.msra.mxu0 0
        %756 = vmatpush.bf16.xpose.msra.mxu0 0
        %757 = vmatpush.bf16.xpose.msra.mxu0 0
        %758 = vmatpush.bf16.xpose.msra.mxu0 0
        %759 = vmatpush.bf16.xpose.msra.mxu0 %v750
        %760 = vmatmul.bf16.gmra.mxu0 %v747
        %v761 = vpop.f32.mrf.mxu0
        %v762 = vadd.f32 %v744, %v761
        %v763 = vpop.f32.mrf.mxu0
        %764 = vdwg.mxu0
        %v766 = vsel %vm745, %v672, 0
        %v769 = vsel %vm745, %v736, 0
        %771 = vmatpush.bf16.xpose.msra.mxu0 0
        %772 = vmatpush.bf16.xpose.msra.mxu0 0
        %773 = vmatpush.bf16.xpose.msra.mxu0 0
        %774 = vmatpush.bf16.xpose.msra.mxu0 0
        %775 = vmatpush.bf16.xpose.msra.mxu0 0
        %776 = vmatpush.bf16.xpose.msra.mxu0 0
        %777 = vmatpush.bf16.xpose.msra.mxu0 0
        %778 = vmatpush.bf16.xpose.msra.mxu0 %v769
        %779 = vmatmul.bf16.gmra.mxu0 %v766
        %v780 = vpop.f32.mrf.mxu0
        %v781 = vadd.f32 %v744, %v780
        %v782 = vpop.f32.mrf.mxu0
        %783 = vdwg.mxu0
        %v785 = vsel %vm745, %v673, 0
        %v788 = vsel %vm745, %v737, 0
        %790 = vmatpush.bf16.xpose.msra.mxu0 0
        %791 = vmatpush.bf16.xpose.msra.mxu0 0
        %792 = vmatpush.bf16.xpose.msra.mxu0 0
        %793 = vmatpush.bf16.xpose.msra.mxu0 0
        %794 = vmatpush.bf16.xpose.msra.mxu0 0
        %795 = vmatpush.bf16.xpose.msra.mxu0 0
        %796 = vmatpush.bf16.xpose.msra.mxu0 0
        %797 = vmatpush.bf16.xpose.msra.mxu0 %v788
        %798 = vmatmul.bf16.gmra.mxu0 %v785
        %v799 = vpop.f32.mrf.mxu0
        %v800 = vadd.f32 %v744, %v799
        %v801 = vpop.f32.mrf.mxu0
        %802 = vdwg.mxu0
        %v804 = vsel %vm745, %v674, 0
        %v807 = vsel %vm745, %v738, 0
        %809 = vmatpush.bf16.xpose.msra.mxu0 0
        %810 = vmatpush.bf16.xpose.msra.mxu0 0
        %811 = vmatpush.bf16.xpose.msra.mxu0 0
        %812 = vmatpush.bf16.xpose.msra.mxu0 0
        %813 = vmatpush.bf16.xpose.msra.mxu0 0
        %814 = vmatpush.bf16.xpose.msra.mxu0 0
        %815 = vmatpush.bf16.xpose.msra.mxu0 0
        %816 = vmatpush.bf16.xpose.msra.mxu0 %v807
        %817 = vmatmul.bf16.gmra.mxu0 %v804
        %v818 = vpop.f32.mrf.mxu0
        %v819 = vadd.f32 %v744, %v818
        %v820 = vpop.f32.mrf.mxu0
        %821 = vdwg.mxu0
        %v822 = vsel %vm745, %v762, -inf
        %823 = vmax.xlane.f32.xlu0 %v822
        %v824 = vpop.xlane.xlu0 %823
        %v825 = vsel %vm745, %v781, -inf
        %826 = vmax.xlane.f32.xlu0 %v825
        %v827 = vpop.xlane.xlu0 %826
        %v828 = vsel %vm745, %v800, -inf
        %829 = vmax.xlane.f32.xlu0 %v828
        %v830 = vpop.xlane.xlu0 %829
        %v831 = vsel %vm745, %v819, -inf
        %832 = vmax.xlane.f32.xlu0 %v831
        %v833 = vpop.xlane.xlu0 %832
        %v834 = vsub.f32 %v762, %v824
        %v835 = vsub.f32 %v781, %v827
        %v836 = vsub.f32 %v800, %v830
        %v837 = vsub.f32 %v819, %v833
        %v838 = vmul.f32 %v834, 1.442695
        %v839 = vpow.pop %v838
        %v840 = vmul.f32 %v835, 1.442695
        %v841 = vpow.pop %v840
        %v842 = vmul.f32 %v836, 1.442695
        %v843 = vpow.pop %v842
        %v844 = vmul.f32 %v837, 1.442695
        %v845 = vpow.pop %v844
        %v846 = vsel %vm745, %v839, 0.0
        %847 = vadd.xlane.f32.xlu0 %v846
        %v848 = vpop.xlane.xlu0 %847
        %v849 = vsel %vm745, %v841, 0.0
        %850 = vadd.xlane.f32.xlu0 %v849
        %v851 = vpop.xlane.xlu0 %850
        %v852 = vsel %vm745, %v843, 0.0
        %853 = vadd.xlane.f32.xlu0 %v852
        %v854 = vpop.xlane.xlu0 %853
        %v855 = vsel %vm745, %v845, 0.0
        %856 = vadd.xlane.f32.xlu0 %v855
        %v857 = vpop.xlane.xlu0 %856
        %v858 = vrcp.pop %v848
        %v859 = vrcp.pop %v851
        %v860 = vrcp.pop %v854
        %v861 = vrcp.pop %v857
        %v862 = vmul.f32 %v839, %v858
        %v863 = vmul.f32 %v841, %v859
        %v864 = vmul.f32 %v843, %v860
        %v865 = vmul.f32 %v845, %v861
        %v866 = vpack.c.bf16 %v862, %v862
        %v867 = vpack.c.bf16 %v863, %v863
        %v868 = vpack.c.bf16 %v864, %v864
        %v869 = vpack.c.bf16 %v865, %v865
        %v871 = vsel %vm745, %v866, 0
        %vm873 = vcmask 1043456
        %v875 = vsel %vm873, %v596, 0
        %877 = vmatpush.bf16.msra.mxu0 0
        %878 = vmatpush.bf16.msra.mxu0 0
        %879 = vmatpush.bf16.msra.mxu0 0
        %880 = vmatpush.bf16.msra.mxu0 0
        %881 = vmatpush.bf16.msra.mxu0 0
        %882 = vmatpush.bf16.msra.mxu0 0
        %883 = vmatpush.bf16.msra.mxu0 0
        %884 = vmatpush.bf16.msra.mxu0 %v875
        %885 = vmatmul.bf16.gmra.mxu0 %v871
        %v886 = vpop.f32.mrf.mxu0
        %v887 = vadd.f32 0.0, %v886
        %v888 = vpop.f32.mrf.mxu0
        %889 = vdwg.mxu0
        %v891 = vsel %vm745, %v867, 0
        %v894 = vsel %vm873, %v597, 0
        %896 = vmatpush.bf16.msra.mxu0 0
        %897 = vmatpush.bf16.msra.mxu0 0
        %898 = vmatpush.bf16.msra.mxu0 0
        %899 = vmatpush.bf16.msra.mxu0 0
        %900 = vmatpush.bf16.msra.mxu0 0
        %901 = vmatpush.bf16.msra.mxu0 0
        %902 = vmatpush.bf16.msra.mxu0 0
        %903 = vmatpush.bf16.msra.mxu0 %v894
        %904 = vmatmul.bf16.gmra.mxu0 %v891
        %v905 = vpop.f32.mrf.mxu0
        %v906 = vadd.f32 0.0, %v905
        %v907 = vpop.f32.mrf.mxu0
        %908 = vdwg.mxu0
        %v910 = vsel %vm745, %v868, 0
        %v913 = vsel %vm873, %v598, 0
        %915 = vmatpush.bf16.msra.mxu0 0
        %916 = vmatpush.bf16.msra.mxu0 0
        %917 = vmatpush.bf16.msra.mxu0 0
        %918 = vmatpush.bf16.msra.mxu0 0
        %919 = vmatpush.bf16.msra.mxu0 0
        %920 = vmatpush.bf16.msra.mxu0 0
        %921 = vmatpush.bf16.msra.mxu0 0
        %922 = vmatpush.bf16.msra.mxu0 %v913
        %923 = vmatmul.bf16.gmra.mxu0 %v910
        %v924 = vpop.f32.mrf.mxu0
        %v925 = vadd.f32 0.0, %v924
        %v926 = vpop.f32.mrf.mxu0
        %927 = vdwg.mxu0
        %v929 = vsel %vm745, %v869, 0
        %v932 = vsel %vm873, %v599, 0
        %934 = vmatpush.bf16.msra.mxu0 0
        %935 = vmatpush.bf16.msra.mxu0 0
        %936 = vmatpush.bf16.msra.mxu0 0
        %937 = vmatpush.bf16.msra.mxu0 0
        %938 = vmatpush.bf16.msra.mxu0 0
        %939 = vmatpush.bf16.msra.mxu0 0
        %940 = vmatpush.bf16.msra.mxu0 0
        %941 = vmatpush.bf16.msra.mxu0 %v932
        %942 = vmatmul.bf16.gmra.mxu0 %v929
        %v943 = vpop.f32.mrf.mxu0
        %v944 = vadd.f32 0.0, %v943
        %v945 = vpop.f32.mrf.mxu0
        %946 = vdwg.mxu0
        %948 = vrot.lane.b32.xlu0 %v906, 8
        %v949 = vpop.permute.xlu0 %948
        %952 = vrot.lane.b32.xlu0 %v925, 16
        %v953 = vpop.permute.xlu0 %952
        %956 = vrot.lane.b32.xlu0 %v944, 24
        %v957 = vpop.permute.xlu0 %956
        %v959 = vsel %vm745, %v887, %v949
        %vm960 = vcmask 130048
        %v961 = vsel %vm960, %v959, %v953
        %vm962 = vcmask 195584
        %v963 = vsel %vm962, %v961, %v957
        %v964 = vpack.c.bf16 %v963, %v963
        %v965 = vld [vmem:[%s6] sm:$0xf]
        %v966 = vld [vmem:[%s6 + $0x4] sm:$0xf]
        %v967 = vld [vmem:[%s6 + $0x8] sm:$0xf]
        %v968 = vld [vmem:[%s6 + $0xc] sm:$0xf]
        %v973 = vunpack.c.l.b16 %v965
        %v974 = vunpack.c.l.b16 %v966
        %v975 = vunpack.c.l.b16 %v967
        %v976 = vunpack.c.l.b16 %v968
        %v977 = vpack.c.b16 %v974, %v973
        %v978 = vpack.c.b16 %v976, %v975
        %v982 = vsel %vm447, %v964, 0
        %984 = vmatpush.bf16.msra.mxu0 0
        %985 = vmatpush.bf16.msra.mxu0 0
        %986 = vmatpush.bf16.msra.mxu0 0
        %987 = vmatpush.bf16.msra.mxu0 0
        %988 = vmatpush.bf16.msra.mxu0 0
        %989 = vmatpush.bf16.msra.mxu0 0
        %990 = vmatpush.bf16.msra.mxu0 %v978
        %991 = vmatpush.bf16.msra.mxu0 %v977
        %992 = vmatmul.bf16.gmra.mxu0 %v982
        %v993 = vpop.f32.mrf.mxu0
        %v994 = vadd.f32 0.0, %v993
        %v995 = vpop.f32.mrf.mxu0
        %996 = vdwg.mxu0
        %v997 = vadd.f32 %v444, %v994
        %v998 = vld [vmem:[%s11] sm:$0x1]
        %v999 = vmul.f32 %v997, %v997
        %v1000 = vsel %vm447, %v999, 0.0
        %1001 = vadd.xlane.f32.xlu0 %v1000
        %v1002 = vpop.xlane.xlu0 %1001
        %v1003 = vmul.f32 %v1002, %v457
        %v1004 = vadd.f32 %v1003, 1e-06
        %v1005 = vrsqrt.pop %v1004
        %v1006 = vmul.f32 %v1005, %v1004
        %v1007 = vmul.f32 %v1006, %v1005
        %v1008 = vmul.f32 0.5, %v1007
        %v1009 = vsub.f32 1.5, %v1008
        %v1010 = vmul.f32 %v1005, %v1009
        %vm1011 = vweird.f32 %v1004
        %vm1012 = vweird.f32 %v1005
        %vm1013 = vmor %vm1011, %vm1012
        %v1014 = vsel %vm1013, %v1005, %v1010
        %v1015 = vmul.f32 %v997, %v1014
        %v1017 = vperm.slane %v998, 0
        %v1019 = vmul.f32 %v1015, %v1017
        %v1020 = vpack.c.bf16 %v1019, %v1019
        %v1021 = vld [vmem:[#allocation2] sm:$0xf]
        %v1022 = vld [vmem:[#allocation2 + $0x4] sm:$0xf]
        %v1023 = vld [vmem:[#allocation2 + $0x8] sm:$0xf]
        %v1024 = vld [vmem:[#allocation2 + $0xc] sm:$0xf]
        %v1029 = vunpack.c.l.b16 %v1021
        %v1030 = vunpack.c.l.b16 %v1022
        %v1031 = vunpack.c.l.b16 %v1023
        %v1032 = vunpack.c.l.b16 %v1024
        %v1033 = vpack.c.b16 %v1030, %v1029
        %v1034 = vpack.c.b16 %v1032, %v1031
        %v1038 = vsel %vm447, %v1020, 0
        %1040 = vmatpush.bf16.msra.mxu0 0
        %1041 = vmatpush.bf16.msra.mxu0 0
        %1042 = vmatpush.bf16.msra.mxu0 0
        %1043 = vmatpush.bf16.msra.mxu0 0
        %1044 = vmatpush.bf16.msra.mxu0 0
        %1045 = vmatpush.bf16.msra.mxu0 0
        %1046 = vmatpush.bf16.msra.mxu0 %v1034
        %1047 = vmatpush.bf16.msra.mxu0 %v1033
        %1048 = vmatmul.bf16.gmra.mxu0 %v1038
        %v1049 = vpop.f32.mrf.mxu0
        %v1050 = vadd.f32 0.0, %v1049
        %v1051 = vpop.f32.mrf.mxu0
        %1052 = vdwg.mxu0
        %v1053 = vld [vmem:[#allocation5] sm:$0xf]
        %v1054 = vld [vmem:[#allocation5 + $0x4] sm:$0xf]
        %v1055 = vld [vmem:[#allocation5 + $0x8] sm:$0xf]
        %v1056 = vld [vmem:[#allocation5 + $0xc] sm:$0xf]
        %v1061 = vunpack.c.l.b16 %v1053
        %v1062 = vunpack.c.l.b16 %v1054
        %v1063 = vunpack.c.l.b16 %v1055
        %v1064 = vunpack.c.l.b16 %v1056
        %v1065 = vpack.c.b16 %v1062, %v1061
        %v1066 = vpack.c.b16 %v1064, %v1063
        %1069 = vmatpush.bf16.msra.mxu0 0
        %1070 = vmatpush.bf16.msra.mxu0 0
        %1071 = vmatpush.bf16.msra.mxu0 0
        %1072 = vmatpush.bf16.msra.mxu0 0
        %1073 = vmatpush.bf16.msra.mxu0 0
        %1074 = vmatpush.bf16.msra.mxu0 0
        %1075 = vmatpush.bf16.msra.mxu0 %v1066
        %1076 = vmatpush.bf16.msra.mxu0 %v1065
        %1077 = vmatmul.bf16.gmra.mxu0 %v1038
        %v1078 = vpop.f32.mrf.mxu0
        %v1079 = vadd.f32 0.0, %v1078
        %v1080 = vpop.f32.mrf.mxu0
        %1081 = vdwg.mxu0
        %v1082 = vxor.u32 %v1050, 2147483648
        %v1083 = vmul.f32 %v1082, 1.442695
        %v1084 = vpow.pop %v1083
        %v1085 = vadd.f32 %v1084, 1.0
        %v1086 = vrcp.pop %v1085
        %v1087 = vmul.f32 %v1085, %v1086
        %v1088 = vsub.f32 1.0, %v1087
        %v1089 = vmul.f32 %v1086, %v1088
        %v1090 = vadd.f32 %v1086, %v1089
        %vm1091 = vweird.f32 %v1085
        %vm1092 = vweird.f32 %v1086
        %vm1093 = vmor %vm1091, %vm1092
        %v1094 = vsel %vm1093, %v1086, %v1090
        %v1095 = vand.u32 2147483647, %v1085
        %vm1096 = vcmp.eq.f32.partialorder %v1095, 8.507059e+37
        %v1097 = vand.u32 %v1085, 2147483648
        %v1098 = vor.u32 1.1754944e-38, %v1097
        %v1099 = vsel %vm1096, %v1098, %v1094
        %v1100 = vmul.f32 1.0, %v1099
        %v1101 = vmul.f32 %v1050, %v1100
        %v1102 = vmul.f32 %v1101, %v1079
        %v1103 = vpack.c.bf16 %v1102, %v1102
        %v1104 = vld [vmem:[%s9] sm:$0xf]
        %v1105 = vld [vmem:[%s9 + $0x4] sm:$0xf]
        %v1106 = vld [vmem:[%s9 + $0x8] sm:$0xf]
        %v1107 = vld [vmem:[%s9 + $0xc] sm:$0xf]
        %v1108 = vld [vmem:[%s9 + $0x10] sm:$0xf]
        %v1109 = vld [vmem:[%s9 + $0x14] sm:$0xf]
        %v1110 = vld [vmem:[%s9 + $0x18] sm:$0xf]
        %v1111 = vld [vmem:[%s9 + $0x1c] sm:$0xf]
        %v1112 = vld [vmem:[%s9 + $0x20] sm:$0xf]
        %v1113 = vld [vmem:[%s9 + $0x24] sm:$0xf]
        %v1114 = vld [vmem:[%s9 + $0x28] sm:$0xf]
        %v1115 = vld [vmem:[%s9 + $0x2c] sm:$0xf]
        %v1116 = vld [vmem:[%s9 + $0x30] sm:$0xf]
        %v1117 = vld [vmem:[%s9 + $0x34] sm:$0xf]
        %v1118 = vld [vmem:[%s9 + $0x38] sm:$0xf]
        %v1119 = vld [vmem:[%s9 + $0x3c] sm:$0xf]
        %v1136 = vunpack.c.l.b16 %v1104
        %v1137 = vunpack.c.l.b16 %v1105
        %v1138 = vunpack.c.l.b16 %v1106
        %v1139 = vunpack.c.l.b16 %v1107
        %v1140 = vunpack.c.l.b16 %v1108
        %v1141 = vunpack.c.l.b16 %v1109
        %v1142 = vunpack.c.l.b16 %v1110
        %v1143 = vunpack.c.l.b16 %v1111
        %v1144 = vunpack.c.l.b16 %v1112
        %v1145 = vunpack.c.l.b16 %v1113
        %v1146 = vunpack.c.l.b16 %v1114
        %v1147 = vunpack.c.l.b16 %v1115
        %v1148 = vunpack.c.l.b16 %v1116
        %v1149 = vunpack.c.l.b16 %v1117
        %v1150 = vunpack.c.l.b16 %v1118
        %v1151 = vunpack.c.l.b16 %v1119
        %v1152 = vpack.c.b16 %v1137, %v1136
        %v1153 = vpack.c.b16 %v1139, %v1138
        %v1154 = vpack.c.b16 %v1141, %v1140
        %v1155 = vpack.c.b16 %v1143, %v1142
        %v1156 = vpack.c.b16 %v1145, %v1144
        %v1157 = vpack.c.b16 %v1147, %v1146
        %v1158 = vpack.c.b16 %v1149, %v1148
        %v1159 = vpack.c.b16 %v1151, %v1150
        %1168 = vmatpush.bf16.msra.mxu0 %v1159
        %1169 = vmatpush.bf16.msra.mxu0 %v1158
        %1170 = vmatpush.bf16.msra.mxu0 %v1157
        %1171 = vmatpush.bf16.msra.mxu0 %v1156
        %1172 = vmatpush.bf16.msra.mxu0 %v1155
        %1173 = vmatpush.bf16.msra.mxu0 %v1154
        %1174 = vmatpush.bf16.msra.mxu0 %v1153
        %1175 = vmatpush.bf16.msra.mxu0 %v1152
        %1176 = vmatmul.bf16.gmra.mxu0 %v1103
        %v1177 = vpop.f32.mrf.mxu0
        %v1178 = vadd.f32 0.0, %v1177
        %v1179 = vpop.f32.mrf.mxu0
        %1180 = vdwg.mxu0
        %v1181 = vadd.f32 %v997, %v1178
        %1182 = vst.msk [vmem:[%s438] sm:$0xff] %vm447, %v1181
        %s1183 = sand.u32 %s293, 1
        %s1184 = scalar_lea.sflag [#allocation4], %s1183
        %s1185 = sand.u32 %s293, 1
        %s1186 = smul.addr %s1185, 8
        %s1187 = scalar_lea.vmem [#allocation7], %s1186
        // Predicated region
        $region77: #{tpu_custom_call.1} parent=67 // pred_check
          %p1188 = pneg %p303
        $region78: #{tpu_custom_call.1} parent=67 // pred_check_branch
          %1190 = sbr.rel (%p1188) target = $region80
        $region79: #{tpu_custom_call.1} parent=67 // pred_region
          %1192 = vsyncadd %s1184, 0
          %s1193 = smul.addr %s28, 8
          %s1194 = scalar_lea.hbm %s12, %s1193
          %s1196 = sshll.u32 %s1187, 4
          %s1197 = int_to_ptr.vmem [resolvable:$true] %s1196
          %s1198 = sshll.u32 %s1194, 4
          %s1199 = int_to_ptr.hbm [resolvable:$true] %s1198
          %1201 = dma.vmem_to_hbm [thread:$0]  %s1197, 128, %s1199, %s1184
        $region80: #{tpu_custom_call.1} parent=67 // pred_fallthru
          _
      $region68: #{tpu_custom_call.1} parent=5 // pred_fallthru
        _
      %p1202 = scmp.le.s32.totalorder 2, %s23
      // Predicated region
      $region81: #{tpu_custom_call.1} parent=5 // pred_check
        %p1203 = pneg %p1202
      $region82: #{tpu_custom_call.1} parent=5 // pred_check_branch
        %1205 = sbr.rel (%p1203) target = $region84
      $region83: #{tpu_custom_call.1} parent=5 // pred_region
        %s1206 = ssub.s32 %s23, 2
        // Predicated region
        $region85: #{tpu_custom_call.1} parent=83 // pred_check
          %p1207 = pneg %p309
        $region86: #{tpu_custom_call.1} parent=83 // pred_check_branch
          %1209 = sbr.rel (%p1207) target = $region88
        $region87: #{tpu_custom_call.1} parent=83 // pred_region
          %s1210 = sand.u32 %s294, 1
          %s1211 = scalar_lea.sflag [#allocation4], %s1210
          %s1212 = sand.u32 %s294, 1
          %s1213 = smul.addr %s1212, 8
          %s1214 = scalar_lea.vmem [#allocation7], %s1213
          %1216 = dma.done %s1211, 128
        $region88: #{tpu_custom_call.1} parent=83 // pred_fallthru
          _
      $region84: #{tpu_custom_call.1} parent=5 // pred_fallthru
        _
    $region6: #{tpu_custom_call.1} parent=1 // loop_footer
      %s27 = sadd.s32 1, %s23
    $region7: #{tpu_custom_call.1} parent=1 // loop_footer_branch
      %22 = sbr.rel target = $region3
    $region8: #{tpu_custom_call.1} parent=1 // loop_exit
      _
    %1217 = vsyncpa [#allocation3], 1
    %s1218 = scalar_lea.sflag [#allocation3], 1
    %1219 = vsyncpa %s1218, 1
    %1220 = vsyncpa [#allocation6], 1
    %1221 = vsyncpa [#allocation4], 1
    %s1222 = scalar_lea.sflag [#allocation4], 1
    %1223 = vsyncpa %s1222, 1

</llo_original>
